<compile_context>
chip_gen: v7x
topology: tpu7x:2x2x1
jax: 0.10.0
libtpu: 0.0.40
codegen_flags: <defaults>
</compile_context>

<pallas_src>
import functools

import jax
import jax.numpy as jnp
from jax.experimental import pallas as pl
from jax.experimental.pallas import tpu as pltpu


def _mlp_kernel(x_ref, w1_ref, b1_ref, w2_ref, b2_ref, w3_ref, o_ref, *, act_dtype):
    # x arrives f32 (4 B/elem HBM traffic, no wrapper-side cast); cast to bf16
    # in-register for the MXU.
    x = x_ref[...].astype(jnp.bfloat16)                                    # (TB, in)
    # Layer 1: MXU matmul (bf16 operands, f32 accumulate); bias + ReLU at act_dtype
    # (bf16 on v6e/v7x which have a bf16 VALU, f32 on v5e).
    h1 = jnp.dot(x, w1_ref[...], preferred_element_type=jnp.float32).astype(act_dtype)
    h1 = jnp.maximum(h1 + b1_ref[...], 0)
    # Layer 2: same.
    h2 = jnp.dot(h1.astype(jnp.bfloat16), w2_ref[...],
                 preferred_element_type=jnp.float32).astype(act_dtype)
    h2 = jnp.maximum(h2 + b2_ref[...], 0)                                  # (TB, h_half)
    # Layer 3 (out_features == 1): VPU multiply + lane reduction in f32 instead of
    # an N=1 MXU matmul; store lane-dense with batch on the lane axis.
    out = jnp.sum(h2.astype(jnp.float32) * w3_ref[...], axis=-1)           # (TB,)
    o_ref[...] = out[None, :].astype(o_ref.dtype)                          # (1, TB)


def _round_up(x, m):
    return (x + m - 1) // m * m


def _device_kind():
    try:
        return jax.devices()[0].device_kind.lower()
    except Exception:
        return ""


def _tile_vmem_bytes(tile_b, in_features, act_bytes):
    """Conservative per-tile VMEM estimate (lane/sublane padded, double-buffered)."""
    lane_in = max(_round_up(in_features, 128), 128)
    x_bytes = 2 * tile_b * lane_in * 4            # f32 x tile, double-buffered
    h_bytes = 2 * tile_b * 128 * act_bytes        # h1 + h2 lane-padded intermediates
    out_bytes = 2 * 8 * tile_b * 4                # (1, tile_b) f32 out, dbl-buffered
    return x_bytes + h_bytes + out_bytes


def _pick_tiling(B, in_features, num_cores, vmem_budget, act_bytes):
    """Returns (tile_b, padded_B)."""
    candidates = (8192, 4096, 2048, 1024, 512, 256, 128)
    fits = lambda t: _tile_vmem_bytes(t, in_features, act_bytes) <= vmem_budget

    # v7x (2 TCs): even number of >=512-row steps so the parallel batch axis
    # shards across both cores; only when per-TC work dwarfs per-step overhead.
    if num_cores >= 2:
        for t in candidates:
            if t >= 512 and B % t == 0 and B // t >= 2 and (B // t) % 2 == 0 and fits(t):
                return t, B
    # Single grid step whenever the whole batch fits the VMEM budget (full-dim
    # blocks are always layout-legal) -- avoids per-step overhead on v5e/v6e.
    if fits(B):
        return B, B
    # Otherwise the largest lane-aligned divisor that fits.
    for t in candidates:
        if B % t == 0 and fits(t):
            return t, B
    # No divisor fits: pad the batch up to the largest lane-aligned tile that fits.
    for t in candidates:
        if fits(t):
            return t, _round_up(B, t)
    return 128, _round_up(B, 128)


def _make_x_spec(tile_b, in_features, n_steps):
    idx = lambda i: (i, 0)
    if n_steps >= 3:
        # Deeper prefetch on the memory-bound x stream; negligible VMEM cost.
        try:
            return pl.BlockSpec((tile_b, in_features), idx, pipeline_mode=pl.Buffered(3))
        except TypeError:
            pass
    return pl.BlockSpec((tile_b, in_features), idx)


def latency_predictor_forward(x, params, *, tile_b=None):
    """x: [B, in_features] float32.  params: dict of w1,b1,w2,b2,w3,b3 ([in,out] W layout)."""
    B, in_features = x.shape
    w1, b1, w2, b2, w3, b3 = (params[k] for k in ("w1", "b1", "w2", "b2", "w3", "b3"))
    h_units = w1.shape[1]
    h_half = w2.shape[1]

    kind = _device_kind()
    num_cores = 2 if "v7" in kind else 1                    # v7x: 2 TensorCores/chip
    bf16_epilogue = ("v6" in kind) or ("v7" in kind)        # bf16 VALU on v6e/v7x
    act_dtype = jnp.bfloat16 if bf16_epilogue else jnp.float32
    act_bytes = 2 if bf16_epilogue else 4
    vmem_budget = (24 << 20) if bf16_epilogue else (12 << 20)

    if tile_b is None:
        tile_b, padded_B = _pick_tiling(B, in_features, num_cores, vmem_budget, act_bytes)
    else:
        padded_B = _round_up(B, tile_b)
    if padded_B != B:
        x = jnp.pad(x, ((0, padded_B - B), (0, 0)))
    n_steps = padded_B // tile_b

    # Small resident operands: bf16 weights for the MXU, biases at the epilogue
    # dtype, final N=1 layer as a f32 row for the VPU reduction.
    w1_b = w1.astype(jnp.bfloat16)
    w2_b = w2.astype(jnp.bfloat16)
    b1_r = b1.reshape(1, h_units).astype(act_dtype)
    b2_r = b2.reshape(1, h_half).astype(act_dtype)
    w3_row = w3.reshape(1, h_half).astype(jnp.float32)

    flops = 2 * padded_B * (in_features * h_units + h_units * h_half + h_half)
    bytes_accessed = (
        padded_B * in_features * 4 + padded_B * 4           # x (f32 in), out (f32)
        + (int(w1_b.size) + int(w2_b.size)) * 2             # bf16 weights
        + (int(b1_r.size) + int(b2_r.size)) * act_bytes
        + int(w3_row.size) * 4
    )

    full = lambda shape: pl.BlockSpec(shape, lambda i: (0, 0))

    out_row = pl.pallas_call(
        functools.partial(_mlp_kernel, act_dtype=act_dtype),
        out_shape=jax.ShapeDtypeStruct((1, padded_B), jnp.float32),
        grid_spec=pltpu.PrefetchScalarGridSpec(
            num_scalar_prefetch=0,
            grid=(n_steps,),
            in_specs=[
                _make_x_spec(tile_b, in_features, n_steps),  # x tile (f32, cast in-kernel)
                full((in_features, h_units)),                # w1 (resident)
                full((1, h_units)),                          # b1
                full((h_units, h_half)),                     # w2
                full((1, h_half)),                           # b2
                full((1, h_half)),                           # w3 as a row
            ],
            out_specs=pl.BlockSpec((1, tile_b), lambda i: (0, i)),  # lane-dense output
        ),
        compiler_params=pltpu.CompilerParams(
            dimension_semantics=("parallel",)
        ),
        cost_estimate=pl.CostEstimate(
            flops=flops, transcendentals=0, bytes_accessed=bytes_accessed
        ),
    )(x, w1_b, b1_r, w2_b, b2_r, w3_row)

    # Final bias is a single scalar: fold it in the wrapper (removes a (1,1) operand).
    out = out_row.reshape(padded_B, 1)[:B]
    return out + b3.reshape(1, 1)


def init_params(key, in_features, h_units):
    """Deterministic synthetic parameters (shapes match nn.Linear layers, transposed)."""
    k1, k2, k3, k4, k5, k6 = jax.random.split(key, 6)
    h_half = h_units // 2
    scale = 0.1
    return {
        "w1": scale * jax.random.normal(k1, (in_features, h_units), jnp.float32),
        "b1": scale * jax.random.normal(k2, (1, h_units), jnp.float32),
        "w2": scale * jax.random.normal(k3, (h_units, h_half), jnp.float32),
        "b2": scale * jax.random.normal(k4, (1, h_half), jnp.float32),
        "w3": scale * jax.random.normal(k5, (h_half, 1), jnp.float32),
        "b3": scale * jax.random.normal(k6, (1, 1), jnp.float32),
    }


def reference_forward(x, p):
    h1 = jnp.maximum(x @ p["w1"] + p["b1"], 0.0)
    h2 = jnp.maximum(h1 @ p["w2"] + p["b2"], 0.0)
    return h2 @ p["w3"] + p["b3"]


if __name__ == "__main__":
    B, in_features, h_units = 256, 16, 32   # small demo; tiling auto-picks one grid step

    key = jax.random.PRNGKey(0)
    kx, kp = jax.random.split(key)
    x = jax.random.normal(kx, (B, in_features), jnp.float32)
    params = init_params(kp, in_features, h_units)

    out = jax.block_until_ready(latency_predictor_forward(x, params))

    ref = reference_forward(x, params)
    assert out.shape == (B, 1)
    # bf16 matmul operands (f32 accumulation) + bf16 epilogue on v6e/v7x -> loose tol.
    assert jnp.allclose(out, ref, atol=3e-2, rtol=3e-2), "mismatch vs reference"

    print("KERNEL_OK")
</pallas_src>

<mosaic_0001>
module attributes {stable_mosaic.version = 11 : i64} {
  func.func @_mlp_kernel(%arg0: i32, %arg1: memref<256x16xf32, #tpu.memory_space<vmem>>, %arg2: memref<16x32xbf16, #tpu.memory_space<vmem>>, %arg3: memref<1x32xf32, #tpu.memory_space<vmem>>, %arg4: memref<32x16xbf16, #tpu.memory_space<vmem>>, %arg5: memref<1x16xf32, #tpu.memory_space<vmem>>, %arg6: memref<1x16xf32, #tpu.memory_space<vmem>>, %arg7: memref<1x256xf32, #tpu.memory_space<vmem>>) attributes {dimension_semantics = [#tpu.dimension_semantics<parallel>], iteration_bounds = array<i64: 1>, scalar_prefetch = 0 : i64, scratch_operands = 0 : i64, tpu.core_type = #tpu.core_type<tc>, window_params = [{transform_indices = @transform_0, window_bounds = array<i64: 256, 16>}, {pipeline_mode = #tpu.pipeline_mode<synchronous>, transform_indices = @transform_1, window_bounds = array<i64: 16, 32>}, {pipeline_mode = #tpu.pipeline_mode<synchronous>, transform_indices = @transform_2, window_bounds = array<i64: 1, 32>}, {pipeline_mode = #tpu.pipeline_mode<synchronous>, transform_indices = @transform_3, window_bounds = array<i64: 32, 16>}, {pipeline_mode = #tpu.pipeline_mode<synchronous>, transform_indices = @transform_4, window_bounds = array<i64: 1, 16>}, {pipeline_mode = #tpu.pipeline_mode<synchronous>, transform_indices = @transform_5, window_bounds = array<i64: 1, 16>}, {transform_indices = @transform_6, window_bounds = array<i64: 1, 256>}]} {
    %c0 = arith.constant 0 : index
    %c0_0 = arith.constant 0 : index
    %0 = vector.load %arg1[%c0, %c0_0] : memref<256x16xf32, #tpu.memory_space<vmem>>, vector<256x16xf32>
    %1 = arith.truncf %0 : vector<256x16xf32> to vector<256x16xbf16>
    %c0_1 = arith.constant 0 : index
    %c0_2 = arith.constant 0 : index
    %2 = vector.load %arg2[%c0_1, %c0_2] : memref<16x32xbf16, #tpu.memory_space<vmem>>, vector<16x32xbf16>
    %cst = arith.constant dense<0.000000e+00> : vector<256x32xf32>
    %3 = tpu.matmul %1, %2, %cst {dimension_numbers = #tpu.dot_dimension_numbers<[1], [0], [0], [1], [0, 0, 1, 1], [], []>} : vector<256x16xbf16>, vector<16x32xbf16>, vector<256x32xf32> -> vector<256x32xf32>
    %c0_3 = arith.constant 0 : index
    %c0_4 = arith.constant 0 : index
    %4 = vector.load %arg3[%c0_3, %c0_4] : memref<1x32xf32, #tpu.memory_space<vmem>>, vector<1x32xf32>
    %5 = vector.broadcast %4 : vector<1x32xf32> to vector<256x32xf32>
    %6 = arith.addf %3, %5 : vector<256x32xf32>
    %cst_5 = arith.constant 0.000000e+00 : f32
    %7 = vector.broadcast %cst_5 : f32 to vector<256x32xf32>
    %8 = arith.maximumf %6, %7 : vector<256x32xf32>
    %9 = arith.truncf %8 : vector<256x32xf32> to vector<256x32xbf16>
    %c0_6 = arith.constant 0 : index
    %c0_7 = arith.constant 0 : index
    %10 = vector.load %arg4[%c0_6, %c0_7] : memref<32x16xbf16, #tpu.memory_space<vmem>>, vector<32x16xbf16>
    %cst_8 = arith.constant dense<0.000000e+00> : vector<256x16xf32>
    %11 = tpu.matmul %9, %10, %cst_8 {dimension_numbers = #tpu.dot_dimension_numbers<[1], [0], [0], [1], [0, 0, 1, 1], [], []>} : vector<256x32xbf16>, vector<32x16xbf16>, vector<256x16xf32> -> vector<256x16xf32>
    %c0_9 = arith.constant 0 : index
    %c0_10 = arith.constant 0 : index
    %12 = vector.load %arg5[%c0_9, %c0_10] : memref<1x16xf32, #tpu.memory_space<vmem>>, vector<1x16xf32>
    %13 = vector.broadcast %12 : vector<1x16xf32> to vector<256x16xf32>
    %14 = arith.addf %11, %13 : vector<256x16xf32>
    %cst_11 = arith.constant 0.000000e+00 : f32
    %15 = vector.broadcast %cst_11 : f32 to vector<256x16xf32>
    %16 = arith.maximumf %14, %15 : vector<256x16xf32>
    %c0_12 = arith.constant 0 : index
    %c0_13 = arith.constant 0 : index
    %17 = vector.load %arg6[%c0_12, %c0_13] : memref<1x16xf32, #tpu.memory_space<vmem>>, vector<1x16xf32>
    %18 = vector.broadcast %17 : vector<1x16xf32> to vector<256x16xf32>
    %19 = arith.mulf %16, %18 : vector<256x16xf32>
    %cst_14 = arith.constant dense<0.000000e+00> : vector<256xf32>
    %20 = vector.multi_reduction <add>, %19, %cst_14 [1] : vector<256x16xf32> to vector<256xf32>
    %21 = vector.shape_cast %20 : vector<256xf32> to vector<1x256xf32>
    %c0_15 = arith.constant 0 : index
    %c0_16 = arith.constant 0 : index
    %22 = vector.load %arg7[%c0_15, %c0_16] : memref<1x256xf32, #tpu.memory_space<vmem>>, vector<1x256xf32>
    tpu.vector_store %arg7[%c0_15, %c0_16], %21 {strides = array<i32>} : memref<1x256xf32, #tpu.memory_space<vmem>>, vector<1x256xf32>,
    return
  }
  func.func @transform_0(%arg0: i32) -> (i32, i32) {
    %c0_i32 = arith.constant 0 : i32
    %c0_i32_0 = arith.constant 0 : i32
    return %arg0, %c0_i32 : i32, i32
  }
  func.func @transform_1(%arg0: i32) -> (i32, i32) {
    %c0_i32 = arith.constant 0 : i32
    %c0_i32_0 = arith.constant 0 : i32
    %c0_i32_1 = arith.constant 0 : i32
    return %c0_i32, %c0_i32_0 : i32, i32
  }
  func.func @transform_2(%arg0: i32) -> (i32, i32) {
    %c0_i32 = arith.constant 0 : i32
    %c0_i32_0 = arith.constant 0 : i32
    %c0_i32_1 = arith.constant 0 : i32
    return %c0_i32, %c0_i32_0 : i32, i32
  }
  func.func @transform_3(%arg0: i32) -> (i32, i32) {
    %c0_i32 = arith.constant 0 : i32
    %c0_i32_0 = arith.constant 0 : i32
    %c0_i32_1 = arith.constant 0 : i32
    return %c0_i32, %c0_i32_0 : i32, i32
  }
  func.func @transform_4(%arg0: i32) -> (i32, i32) {
    %c0_i32 = arith.constant 0 : i32
    %c0_i32_0 = arith.constant 0 : i32
    %c0_i32_1 = arith.constant 0 : i32
    return %c0_i32, %c0_i32_0 : i32, i32
  }
  func.func @transform_5(%arg0: i32) -> (i32, i32) {
    %c0_i32 = arith.constant 0 : i32
    %c0_i32_0 = arith.constant 0 : i32
    %c0_i32_1 = arith.constant 0 : i32
    return %c0_i32, %c0_i32_0 : i32, i32
  }
  func.func @transform_6(%arg0: i32) -> (i32, i32) {
    %c0_i32 = arith.constant 0 : i32
    %c0_i32_0 = arith.constant 0 : i32
    return %c0_i32, %arg0 : i32, i32
  }
}

</mosaic_0001>

<llo_original>
// kernel: tpu_custom_call.1
$region0: #{tpu_custom_call.1}
  #allocation0 [shape = 'u32[]', space=smem, size = 0x4, offset = 0x4, fixed_abs, tag = 'smem constant byte address 0x4 - core index']
  #allocation1 [shape = 'u32[144,128]{1,0:T(1,128)}', space=vmem, size = 0x12000, scoped, tag = 'internal scratch']
  %s0 = inlined_call_operand.vmem [shape: f32[256,16], index: 0, kind: input, shape index: {}]
  %s1 = inlined_call_operand.vmem [shape: bf16[16,32], index: 1, kind: input, shape index: {}]
  %s2 = inlined_call_operand.vmem [shape: f32[1,32], index: 2, kind: input, shape index: {}]
  %s3 = inlined_call_operand.vmem [shape: bf16[32,16], index: 3, kind: input, shape index: {}]
  %s4 = inlined_call_operand.vmem [shape: f32[1,16], index: 4, kind: input, shape index: {}]
  %s5 = inlined_call_operand.vmem [shape: f32[1,16], index: 5, kind: input, shape index: {}]
  %s6 = inlined_call_operand.hbm [shape: f32[1,256], index: 6, kind: output, shape index: {}]
  %s7 = sld [smem:[#allocation0]]
  $region34: #{tpu_custom_call.1} parent=0
    _
  %s9 = ssub.s32 1, %s7
  %s10 = scalar_select 0, %s9, %s7
  $region1: #{tpu_custom_call.1} parent=0
    #allocation2 [shape = 'u8[1024]{0}', space=vmem, size = 0x400, scoped, tag = 'output window, operand 0, single buffered']
    #allocation3 [shape = 's32[1]{0}', space=sflag, size = 0x4, scoped, tag = 'scoped memory for tpu_custom_call.1']
    %11 = vsyncpa [#allocation3], 0
    // Predicated region
    $region2: #{tpu_custom_call.1} parent=1 // pred_check
      _
    $region3: #{tpu_custom_call.1} parent=1 // pred_check_branch
      %13 = sbr.rel (0) target = $region5
    $region4: #{tpu_custom_call.1} parent=1 // pred_region
      _
    $region5: #{tpu_custom_call.1} parent=1 // pred_fallthru
      _
    // Predicated region
    $region6: #{tpu_custom_call.1} parent=1 // pred_check
      _
    $region7: #{tpu_custom_call.1} parent=1 // pred_check_branch
      %15 = sbr.rel (0) target = $region9
    $region8: #{tpu_custom_call.1} parent=1 // pred_region
      _
    $region9: #{tpu_custom_call.1} parent=1 // pred_fallthru
      _
    // Predicated region
    $region10: #{tpu_custom_call.1} parent=1 // pred_check
      _
    $region11: #{tpu_custom_call.1} parent=1 // pred_check_branch
      %17 = sbr.rel (0) target = $region13
    $region12: #{tpu_custom_call.1} parent=1 // pred_region
      _
    $region13: #{tpu_custom_call.1} parent=1 // pred_fallthru
      _
    // Predicated region
    $region14: #{tpu_custom_call.1} parent=1 // pred_check
      _
    $region15: #{tpu_custom_call.1} parent=1 // pred_check_branch
      %19 = sbr.rel (0) target = $region17
    $region16: #{tpu_custom_call.1} parent=1 // pred_region
      _
    $region17: #{tpu_custom_call.1} parent=1 // pred_fallthru
      _
    // Predicated region
    $region18: #{tpu_custom_call.1} parent=1 // pred_check
      _
    $region19: #{tpu_custom_call.1} parent=1 // pred_check_branch
      %21 = sbr.rel (0) target = $region21
    $region20: #{tpu_custom_call.1} parent=1 // pred_region
      _
    $region21: #{tpu_custom_call.1} parent=1 // pred_fallthru
      _
    // Predicated region
    $region22: #{tpu_custom_call.1} parent=1 // pred_check
      _
    $region23: #{tpu_custom_call.1} parent=1 // pred_check_branch
      %23 = sbr.rel (0) target = $region25
    $region24: #{tpu_custom_call.1} parent=1 // pred_region
      _
    $region25: #{tpu_custom_call.1} parent=1 // pred_fallthru
      _
    %v25 = vld [vmem:[%s0] sm:$0xff]
    %v26 = vld [vmem:[%s0 + $0x8] sm:$0xff]
    %v27 = vld [vmem:[%s0 + $0x10] sm:$0xff]
    %v28 = vld [vmem:[%s0 + $0x18] sm:$0xff]
    %v29 = vld [vmem:[%s0 + $0x20] sm:$0xff]
    %v30 = vld [vmem:[%s0 + $0x28] sm:$0xff]
    %v31 = vld [vmem:[%s0 + $0x30] sm:$0xff]
    %v32 = vld [vmem:[%s0 + $0x38] sm:$0xff]
    %v33 = vld [vmem:[%s0 + $0x40] sm:$0xff]
    %v34 = vld [vmem:[%s0 + $0x48] sm:$0xff]
    %v35 = vld [vmem:[%s0 + $0x50] sm:$0xff]
    %v36 = vld [vmem:[%s0 + $0x58] sm:$0xff]
    %v37 = vld [vmem:[%s0 + $0x60] sm:$0xff]
    %v38 = vld [vmem:[%s0 + $0x68] sm:$0xff]
    %v39 = vld [vmem:[%s0 + $0x70] sm:$0xff]
    %v40 = vld [vmem:[%s0 + $0x78] sm:$0xff]
    %v41 = vld [vmem:[%s0 + $0x80] sm:$0xff]
    %v42 = vld [vmem:[%s0 + $0x88] sm:$0xff]
    %v43 = vld [vmem:[%s0 + $0x90] sm:$0xff]
    %v44 = vld [vmem:[%s0 + $0x98] sm:$0xff]
    %v45 = vld [vmem:[%s0 + $0xa0] sm:$0xff]
    %v46 = vld [vmem:[%s0 + $0xa8] sm:$0xff]
    %v47 = vld [vmem:[%s0 + $0xb0] sm:$0xff]
    %v48 = vld [vmem:[%s0 + $0xb8] sm:$0xff]
    %v49 = vld [vmem:[%s0 + $0xc0] sm:$0xff]
    %v50 = vld [vmem:[%s0 + $0xc8] sm:$0xff]
    %v51 = vld [vmem:[%s0 + $0xd0] sm:$0xff]
    %v52 = vld [vmem:[%s0 + $0xd8] sm:$0xff]
    %v53 = vld [vmem:[%s0 + $0xe0] sm:$0xff]
    %v54 = vld [vmem:[%s0 + $0xe8] sm:$0xff]
    %v55 = vld [vmem:[%s0 + $0xf0] sm:$0xff]
    %v56 = vld [vmem:[%s0 + $0xf8] sm:$0xff]
    %v57 = vpack.c.bf16 %v26, %v25
    %v58 = vpack.c.bf16 %v28, %v27
    %v59 = vpack.c.bf16 %v30, %v29
    %v60 = vpack.c.bf16 %v32, %v31
    %v61 = vpack.c.bf16 %v34, %v33
    %v62 = vpack.c.bf16 %v36, %v35
    %v63 = vpack.c.bf16 %v38, %v37
    %v64 = vpack.c.bf16 %v40, %v39
    %v65 = vpack.c.bf16 %v42, %v41
    %v66 = vpack.c.bf16 %v44, %v43
    %v67 = vpack.c.bf16 %v46, %v45
    %v68 = vpack.c.bf16 %v48, %v47
    %v69 = vpack.c.bf16 %v50, %v49
    %v70 = vpack.c.bf16 %v52, %v51
    %v71 = vpack.c.bf16 %v54, %v53
    %v72 = vpack.c.bf16 %v56, %v55
    %v73 = vld [vmem:[%s1] sm:$0xf]
    %v74 = vld [vmem:[%s1 + $0x4] sm:$0xf]
    %v75 = vld [vmem:[%s2] sm:$0x1]
    %v77 = vlaneseq
    %v78 = vshrl.u32 %v77, 7
    %v79 = vsub.s32 0, %v78
    %v80 = vrot.slane %v75, %v79
    %v84 = vunpack.c.l.b16 %v73
    %v85 = vunpack.c.l.b16 %v74
    %v86 = vpack.c.b16 %v85, %v84
    %vm88 = vcmask 130048
    %v90 = vsel %vm88, %v57, 0
    %v93 = vsel %vm88, %v58, 0
    %v96 = vsel %vm88, %v59, 0
    %v99 = vsel %vm88, %v60, 0
    %v102 = vsel %vm88, %v61, 0
    %v105 = vsel %vm88, %v62, 0
    %v108 = vsel %vm88, %v63, 0
    %v111 = vsel %vm88, %v64, 0
    %v114 = vsel %vm88, %v65, 0
    %v117 = vsel %vm88, %v66, 0
    %v120 = vsel %vm88, %v67, 0
    %v123 = vsel %vm88, %v68, 0
    %v126 = vsel %vm88, %v69, 0
    %v129 = vsel %vm88, %v70, 0
    %v132 = vsel %vm88, %v71, 0
    %v135 = vsel %vm88, %v72, 0
    %137 = vmatprep.subr.bf16.mxu0 0
    %138 = vmatpush1.bf16.msra.mxu0 %v86
    %139 = vmatprep.subr.bf16.mxu0 0
    %140 = vmatpush1.bf16.msra.mxu0 0
    %141 = vmatprep.subr.bf16.mxu0 0
    %142 = vmatpush1.bf16.msra.mxu0 0
    %143 = vmatprep.subr.bf16.mxu0 0
    %144 = vmatpush1.bf16.msra.mxu0 0
    %145 = vmatprep.subr.bf16.mxu0 0
    %146 = vmatpush1.bf16.msra.mxu0 0
    %147 = vmatprep.subr.bf16.mxu0 0
    %148 = vmatpush1.bf16.msra.mxu0 0
    %149 = vmatprep.subr.bf16.mxu0 0
    %150 = vmatpush1.bf16.msra.mxu0 0
    %151 = vmatprep.subr.bf16.mxu0 0
    %152 = vmatpush1.bf16.msra.mxu0 0
    %153 = vmatprep.subr.bf16.mxu0 0
    %154 = vmatpush1.bf16.msra.mxu0 0
    %155 = vmatprep.subr.bf16.mxu0 0
    %156 = vmatpush1.bf16.msra.mxu0 0
    %157 = vmatprep.subr.bf16.mxu0 0
    %158 = vmatpush1.bf16.msra.mxu0 0
    %159 = vmatprep.subr.bf16.mxu0 0
    %160 = vmatpush1.bf16.msra.mxu0 0
    %161 = vmatprep.subr.bf16.mxu0 0
    %162 = vmatpush1.bf16.msra.mxu0 0
    %163 = vmatprep.subr.bf16.mxu0 0
    %164 = vmatpush1.bf16.msra.mxu0 0
    %165 = vmatprep.subr.bf16.mxu0 0
    %166 = vmatpush1.bf16.msra.mxu0 0
    %167 = vmatprep.subr.bf16.mxu0 0
    %168 = vmatpush1.bf16.msra.mxu0 0
    %169 = vmatprep.mubr.bf16.mxu0 0
    %170 = vmatmul.mubr.bf16.gmra.mrb[0].mxu0 %v90
    %v171 = vpop.f32.mrb[0].mxu0
    %v172 = vadd.f32 %v80, %v171
    %v173 = vpop.f32.mrb[0].mxu0
    %v174 = vpop.f32.mrb[0].mxu0
    %v175 = vadd.f32 %v80, %v174
    %v176 = vpop.f32.mrb[0].mxu0
    %177 = vmatprep.mubr.bf16.mxu0 0
    %178 = vmatmul.mubr.bf16.gmra.mrb[0].mxu0 %v93
    %v179 = vpop.f32.mrb[0].mxu0
    %v180 = vadd.f32 %v80, %v179
    %v181 = vpop.f32.mrb[0].mxu0
    %v182 = vpop.f32.mrb[0].mxu0
    %v183 = vadd.f32 %v80, %v182
    %v184 = vpop.f32.mrb[0].mxu0
    %185 = vmatprep.mubr.bf16.mxu0 0
    %186 = vmatmul.mubr.bf16.gmra.mrb[0].mxu0 %v96
    %v187 = vpop.f32.mrb[0].mxu0
    %v188 = vadd.f32 %v80, %v187
    %v189 = vpop.f32.mrb[0].mxu0
    %v190 = vpop.f32.mrb[0].mxu0
    %v191 = vadd.f32 %v80, %v190
    %v192 = vpop.f32.mrb[0].mxu0
    %193 = vmatprep.mubr.bf16.mxu0 0
    %194 = vmatmul.mubr.bf16.gmra.mrb[0].mxu0 %v99
    %v195 = vpop.f32.mrb[0].mxu0
    %v196 = vadd.f32 %v80, %v195
    %v197 = vpop.f32.mrb[0].mxu0
    %v198 = vpop.f32.mrb[0].mxu0
    %v199 = vadd.f32 %v80, %v198
    %v200 = vpop.f32.mrb[0].mxu0
    %201 = vmatprep.mubr.bf16.mxu0 0
    %202 = vmatmul.mubr.bf16.gmra.mrb[0].mxu0 %v102
    %v203 = vpop.f32.mrb[0].mxu0
    %v204 = vadd.f32 %v80, %v203
    %v205 = vpop.f32.mrb[0].mxu0
    %v206 = vpop.f32.mrb[0].mxu0
    %v207 = vadd.f32 %v80, %v206
    %v208 = vpop.f32.mrb[0].mxu0
    %209 = vmatprep.mubr.bf16.mxu0 0
    %210 = vmatmul.mubr.bf16.gmra.mrb[0].mxu0 %v105
    %v211 = vpop.f32.mrb[0].mxu0
    %v212 = vadd.f32 %v80, %v211
    %v213 = vpop.f32.mrb[0].mxu0
    %v214 = vpop.f32.mrb[0].mxu0
    %v215 = vadd.f32 %v80, %v214
    %v216 = vpop.f32.mrb[0].mxu0
    %217 = vmatprep.mubr.bf16.mxu0 0
    %218 = vmatmul.mubr.bf16.gmra.mrb[0].mxu0 %v108
    %v219 = vpop.f32.mrb[0].mxu0
    %v220 = vadd.f32 %v80, %v219
    %v221 = vpop.f32.mrb[0].mxu0
    %v222 = vpop.f32.mrb[0].mxu0
    %v223 = vadd.f32 %v80, %v222
    %v224 = vpop.f32.mrb[0].mxu0
    %225 = vmatprep.mubr.bf16.mxu0 0
    %226 = vmatmul.mubr.bf16.gmra.mrb[0].mxu0 %v111
    %v227 = vpop.f32.mrb[0].mxu0
    %v228 = vadd.f32 %v80, %v227
    %v229 = vpop.f32.mrb[0].mxu0
    %v230 = vpop.f32.mrb[0].mxu0
    %v231 = vadd.f32 %v80, %v230
    %v232 = vpop.f32.mrb[0].mxu0
    %233 = vmatprep.mubr.bf16.mxu0 0
    %234 = vmatmul.mubr.bf16.gmra.mrb[0].mxu0 %v114
    %v235 = vpop.f32.mrb[0].mxu0
    %v236 = vadd.f32 %v80, %v235
    %v237 = vpop.f32.mrb[0].mxu0
    %v238 = vpop.f32.mrb[0].mxu0
    %v239 = vadd.f32 %v80, %v238
    %v240 = vpop.f32.mrb[0].mxu0
    %241 = vmatprep.mubr.bf16.mxu0 0
    %242 = vmatmul.mubr.bf16.gmra.mrb[0].mxu0 %v117
    %v243 = vpop.f32.mrb[0].mxu0
    %v244 = vadd.f32 %v80, %v243
    %v245 = vpop.f32.mrb[0].mxu0
    %v246 = vpop.f32.mrb[0].mxu0
    %v247 = vadd.f32 %v80, %v246
    %v248 = vpop.f32.mrb[0].mxu0
    %249 = vmatprep.mubr.bf16.mxu0 0
    %250 = vmatmul.mubr.bf16.gmra.mrb[0].mxu0 %v120
    %v251 = vpop.f32.mrb[0].mxu0
    %v252 = vadd.f32 %v80, %v251
    %v253 = vpop.f32.mrb[0].mxu0
    %v254 = vpop.f32.mrb[0].mxu0
    %v255 = vadd.f32 %v80, %v254
    %v256 = vpop.f32.mrb[0].mxu0
    %257 = vmatprep.mubr.bf16.mxu0 0
    %258 = vmatmul.mubr.bf16.gmra.mrb[0].mxu0 %v123
    %v259 = vpop.f32.mrb[0].mxu0
    %v260 = vadd.f32 %v80, %v259
    %v261 = vpop.f32.mrb[0].mxu0
    %v262 = vpop.f32.mrb[0].mxu0
    %v263 = vadd.f32 %v80, %v262
    %v264 = vpop.f32.mrb[0].mxu0
    %265 = vmatprep.mubr.bf16.mxu0 0
    %266 = vmatmul.mubr.bf16.gmra.mrb[0].mxu0 %v126
    %v267 = vpop.f32.mrb[0].mxu0
    %v268 = vadd.f32 %v80, %v267
    %v269 = vpop.f32.mrb[0].mxu0
    %v270 = vpop.f32.mrb[0].mxu0
    %v271 = vadd.f32 %v80, %v270
    %v272 = vpop.f32.mrb[0].mxu0
    %273 = vmatprep.mubr.bf16.mxu0 0
    %274 = vmatmul.mubr.bf16.gmra.mrb[0].mxu0 %v129
    %v275 = vpop.f32.mrb[0].mxu0
    %v276 = vadd.f32 %v80, %v275
    %v277 = vpop.f32.mrb[0].mxu0
    %v278 = vpop.f32.mrb[0].mxu0
    %v279 = vadd.f32 %v80, %v278
    %v280 = vpop.f32.mrb[0].mxu0
    %281 = vmatprep.mubr.bf16.mxu0 0
    %282 = vmatmul.mubr.bf16.gmra.mrb[0].mxu0 %v132
    %v283 = vpop.f32.mrb[0].mxu0
    %v284 = vadd.f32 %v80, %v283
    %v285 = vpop.f32.mrb[0].mxu0
    %v286 = vpop.f32.mrb[0].mxu0
    %v287 = vadd.f32 %v80, %v286
    %v288 = vpop.f32.mrb[0].mxu0
    %289 = vmatprep.mubr.bf16.mxu0 0
    %290 = vmatmul.mubr.bf16.gmra.mrb[0].mxu0 %v135
    %v291 = vpop.f32.mrb[0].mxu0
    %v292 = vadd.f32 %v80, %v291
    %v293 = vpop.f32.mrb[0].mxu0
    %v294 = vpop.f32.mrb[0].mxu0
    %v295 = vadd.f32 %v80, %v294
    %v296 = vpop.f32.mrb[0].mxu0
    %297 = vdwg.mxu0
    %v298 = vmax.f32 %v172, 0.0
    %v299 = vmax.f32 %v175, 0.0
    %v300 = vmax.f32 %v180, 0.0
    %v301 = vmax.f32 %v183, 0.0
    %v302 = vmax.f32 %v188, 0.0
    %v303 = vmax.f32 %v191, 0.0
    %v304 = vmax.f32 %v196, 0.0
    %v305 = vmax.f32 %v199, 0.0
    %v306 = vmax.f32 %v204, 0.0
    %v307 = vmax.f32 %v207, 0.0
    %v308 = vmax.f32 %v212, 0.0
    %v309 = vmax.f32 %v215, 0.0
    %v310 = vmax.f32 %v220, 0.0
    %v311 = vmax.f32 %v223, 0.0
    %v312 = vmax.f32 %v228, 0.0
    %v313 = vmax.f32 %v231, 0.0
    %v314 = vmax.f32 %v236, 0.0
    %v315 = vmax.f32 %v239, 0.0
    %v316 = vmax.f32 %v244, 0.0
    %v317 = vmax.f32 %v247, 0.0
    %v318 = vmax.f32 %v252, 0.0
    %v319 = vmax.f32 %v255, 0.0
    %v320 = vmax.f32 %v260, 0.0
    %v321 = vmax.f32 %v263, 0.0
    %v322 = vmax.f32 %v268, 0.0
    %v323 = vmax.f32 %v271, 0.0
    %v324 = vmax.f32 %v276, 0.0
    %v325 = vmax.f32 %v279, 0.0
    %v326 = vmax.f32 %v284, 0.0
    %v327 = vmax.f32 %v287, 0.0
    %v328 = vmax.f32 %v292, 0.0
    %v329 = vmax.f32 %v295, 0.0
    %v330 = vpack.c.bf16 %v299, %v298
    %v331 = vpack.c.bf16 %v301, %v300
    %v332 = vpack.c.bf16 %v303, %v302
    %v333 = vpack.c.bf16 %v305, %v304
    %v334 = vpack.c.bf16 %v307, %v306
    %v335 = vpack.c.bf16 %v309, %v308
    %v336 = vpack.c.bf16 %v311, %v310
    %v337 = vpack.c.bf16 %v313, %v312
    %v338 = vpack.c.bf16 %v315, %v314
    %v339 = vpack.c.bf16 %v317, %v316
    %v340 = vpack.c.bf16 %v319, %v318
    %v341 = vpack.c.bf16 %v321, %v320
    %v342 = vpack.c.bf16 %v323, %v322
    %v343 = vpack.c.bf16 %v325, %v324
    %v344 = vpack.c.bf16 %v327, %v326
    %v345 = vpack.c.bf16 %v329, %v328
    %v346 = vld [vmem:[%s3] sm:$0xf]
    %v347 = vld [vmem:[%s3 + $0x4] sm:$0xf]
    %v348 = vld [vmem:[%s3 + $0x8] sm:$0xf]
    %v349 = vld [vmem:[%s3 + $0xc] sm:$0xf]
    %v350 = vld [vmem:[%s4] sm:$0x1]
    %v352 = vlaneseq
    %v353 = vshrl.u32 %v352, 7
    %v354 = vsub.s32 0, %v353
    %v355 = vrot.slane %v350, %v354
    %v361 = vunpack.c.l.b16 %v346
    %v362 = vunpack.c.l.b16 %v347
    %v363 = vunpack.c.l.b16 %v348
    %v364 = vunpack.c.l.b16 %v349
    %v365 = vpack.c.b16 %v362, %v361
    %v366 = vpack.c.b16 %v364, %v363
    %vm369 = vcmask 261120
    %v371 = vsel %vm369, %v330, 0
    %v374 = vsel %vm369, %v331, 0
    %v377 = vsel %vm369, %v332, 0
    %v380 = vsel %vm369, %v333, 0
    %v383 = vsel %vm369, %v334, 0
    %v386 = vsel %vm369, %v335, 0
    %v389 = vsel %vm369, %v336, 0
    %v392 = vsel %vm369, %v337, 0
    %v395 = vsel %vm369, %v338, 0
    %v398 = vsel %vm369, %v339, 0
    %v401 = vsel %vm369, %v340, 0
    %v404 = vsel %vm369, %v341, 0
    %v407 = vsel %vm369, %v342, 0
    %v410 = vsel %vm369, %v343, 0
    %v413 = vsel %vm369, %v344, 0
    %v416 = vsel %vm369, %v345, 0
    %418 = vmatprep.subr.bf16.mxu0 0
    %419 = vmatpush1.bf16.msra.mxu0 %v365
    %420 = vmatprep.subr.bf16.mxu0 0
    %421 = vmatpush1.bf16.msra.mxu0 %v366
    %422 = vmatprep.subr.bf16.mxu0 0
    %423 = vmatpush1.bf16.msra.mxu0 0
    %424 = vmatprep.subr.bf16.mxu0 0
    %425 = vmatpush1.bf16.msra.mxu0 0
    %426 = vmatprep.subr.bf16.mxu0 0
    %427 = vmatpush1.bf16.msra.mxu0 0
    %428 = vmatprep.subr.bf16.mxu0 0
    %429 = vmatpush1.bf16.msra.mxu0 0
    %430 = vmatprep.subr.bf16.mxu0 0
    %431 = vmatpush1.bf16.msra.mxu0 0
    %432 = vmatprep.subr.bf16.mxu0 0
    %433 = vmatpush1.bf16.msra.mxu0 0
    %434 = vmatprep.subr.bf16.mxu0 0
    %435 = vmatpush1.bf16.msra.mxu0 0
    %436 = vmatprep.subr.bf16.mxu0 0
    %437 = vmatpush1.bf16.msra.mxu0 0
    %438 = vmatprep.subr.bf16.mxu0 0
    %439 = vmatpush1.bf16.msra.mxu0 0
    %440 = vmatprep.subr.bf16.mxu0 0
    %441 = vmatpush1.bf16.msra.mxu0 0
    %442 = vmatprep.subr.bf16.mxu0 0
    %443 = vmatpush1.bf16.msra.mxu0 0
    %444 = vmatprep.subr.bf16.mxu0 0
    %445 = vmatpush1.bf16.msra.mxu0 0
    %446 = vmatprep.subr.bf16.mxu0 0
    %447 = vmatpush1.bf16.msra.mxu0 0
    %448 = vmatprep.subr.bf16.mxu0 0
    %449 = vmatpush1.bf16.msra.mxu0 0
    %450 = vmatprep.mubr.bf16.mxu0 0
    %451 = vmatmul.mubr.bf16.gmra.mrb[0].mxu0 %v371
    %v452 = vpop.f32.mrb[0].mxu0
    %v453 = vadd.f32 %v355, %v452
    %v454 = vpop.f32.mrb[0].mxu0
    %v455 = vpop.f32.mrb[0].mxu0
    %v456 = vadd.f32 %v355, %v455
    %v457 = vpop.f32.mrb[0].mxu0
    %458 = vmatprep.mubr.bf16.mxu0 0
    %459 = vmatmul.mubr.bf16.gmra.mrb[0].mxu0 %v374
    %v460 = vpop.f32.mrb[0].mxu0
    %v461 = vadd.f32 %v355, %v460
    %v462 = vpop.f32.mrb[0].mxu0
    %v463 = vpop.f32.mrb[0].mxu0
    %v464 = vadd.f32 %v355, %v463
    %v465 = vpop.f32.mrb[0].mxu0
    %466 = vmatprep.mubr.bf16.mxu0 0
    %467 = vmatmul.mubr.bf16.gmra.mrb[0].mxu0 %v377
    %v468 = vpop.f32.mrb[0].mxu0
    %v469 = vadd.f32 %v355, %v468
    %v470 = vpop.f32.mrb[0].mxu0
    %v471 = vpop.f32.mrb[0].mxu0
    %v472 = vadd.f32 %v355, %v471
    %v473 = vpop.f32.mrb[0].mxu0
    %474 = vmatprep.mubr.bf16.mxu0 0
    %475 = vmatmul.mubr.bf16.gmra.mrb[0].mxu0 %v380
    %v476 = vpop.f32.mrb[0].mxu0
    %v477 = vadd.f32 %v355, %v476
    %v478 = vpop.f32.mrb[0].mxu0
    %v479 = vpop.f32.mrb[0].mxu0
    %v480 = vadd.f32 %v355, %v479
    %v481 = vpop.f32.mrb[0].mxu0
    %482 = vmatprep.mubr.bf16.mxu0 0
    %483 = vmatmul.mubr.bf16.gmra.mrb[0].mxu0 %v383
    %v484 = vpop.f32.mrb[0].mxu0
    %v485 = vadd.f32 %v355, %v484
    %v486 = vpop.f32.mrb[0].mxu0
    %v487 = vpop.f32.mrb[0].mxu0
    %v488 = vadd.f32 %v355, %v487
    %v489 = vpop.f32.mrb[0].mxu0
    %490 = vmatprep.mubr.bf16.mxu0 0
    %491 = vmatmul.mubr.bf16.gmra.mrb[0].mxu0 %v386
    %v492 = vpop.f32.mrb[0].mxu0
    %v493 = vadd.f32 %v355, %v492
    %v494 = vpop.f32.mrb[0].mxu0
    %v495 = vpop.f32.mrb[0].mxu0
    %v496 = vadd.f32 %v355, %v495
    %v497 = vpop.f32.mrb[0].mxu0
    %498 = vmatprep.mubr.bf16.mxu0 0
    %499 = vmatmul.mubr.bf16.gmra.mrb[0].mxu0 %v389
    %v500 = vpop.f32.mrb[0].mxu0
    %v501 = vadd.f32 %v355, %v500
    %v502 = vpop.f32.mrb[0].mxu0
    %v503 = vpop.f32.mrb[0].mxu0
    %v504 = vadd.f32 %v355, %v503
    %v505 = vpop.f32.mrb[0].mxu0
    %506 = vmatprep.mubr.bf16.mxu0 0
    %507 = vmatmul.mubr.bf16.gmra.mrb[0].mxu0 %v392
    %v508 = vpop.f32.mrb[0].mxu0
    %v509 = vadd.f32 %v355, %v508
    %v510 = vpop.f32.mrb[0].mxu0
    %v511 = vpop.f32.mrb[0].mxu0
    %v512 = vadd.f32 %v355, %v511
    %v513 = vpop.f32.mrb[0].mxu0
    %514 = vmatprep.mubr.bf16.mxu0 0
    %515 = vmatmul.mubr.bf16.gmra.mrb[0].mxu0 %v395
    %v516 = vpop.f32.mrb[0].mxu0
    %v517 = vadd.f32 %v355, %v516
    %v518 = vpop.f32.mrb[0].mxu0
    %v519 = vpop.f32.mrb[0].mxu0
    %v520 = vadd.f32 %v355, %v519
    %v521 = vpop.f32.mrb[0].mxu0
    %522 = vmatprep.mubr.bf16.mxu0 0
    %523 = vmatmul.mubr.bf16.gmra.mrb[0].mxu0 %v398
    %v524 = vpop.f32.mrb[0].mxu0
    %v525 = vadd.f32 %v355, %v524
    %v526 = vpop.f32.mrb[0].mxu0
    %v527 = vpop.f32.mrb[0].mxu0
    %v528 = vadd.f32 %v355, %v527
    %v529 = vpop.f32.mrb[0].mxu0
    %530 = vmatprep.mubr.bf16.mxu0 0
    %531 = vmatmul.mubr.bf16.gmra.mrb[0].mxu0 %v401
    %v532 = vpop.f32.mrb[0].mxu0
    %v533 = vadd.f32 %v355, %v532
    %v534 = vpop.f32.mrb[0].mxu0
    %v535 = vpop.f32.mrb[0].mxu0
    %v536 = vadd.f32 %v355, %v535
    %v537 = vpop.f32.mrb[0].mxu0
    %538 = vmatprep.mubr.bf16.mxu0 0
    %539 = vmatmul.mubr.bf16.gmra.mrb[0].mxu0 %v404
    %v540 = vpop.f32.mrb[0].mxu0
    %v541 = vadd.f32 %v355, %v540
    %v542 = vpop.f32.mrb[0].mxu0
    %v543 = vpop.f32.mrb[0].mxu0
    %v544 = vadd.f32 %v355, %v543
    %v545 = vpop.f32.mrb[0].mxu0
    %546 = vmatprep.mubr.bf16.mxu0 0
    %547 = vmatmul.mubr.bf16.gmra.mrb[0].mxu0 %v407
    %v548 = vpop.f32.mrb[0].mxu0
    %v549 = vadd.f32 %v355, %v548
    %v550 = vpop.f32.mrb[0].mxu0
    %v551 = vpop.f32.mrb[0].mxu0
    %v552 = vadd.f32 %v355, %v551
    %v553 = vpop.f32.mrb[0].mxu0
    %554 = vmatprep.mubr.bf16.mxu0 0
    %555 = vmatmul.mubr.bf16.gmra.mrb[0].mxu0 %v410
    %v556 = vpop.f32.mrb[0].mxu0
    %v557 = vadd.f32 %v355, %v556
    %v558 = vpop.f32.mrb[0].mxu0
    %v559 = vpop.f32.mrb[0].mxu0
    %v560 = vadd.f32 %v355, %v559
    %v561 = vpop.f32.mrb[0].mxu0
    %562 = vmatprep.mubr.bf16.mxu0 0
    %563 = vmatmul.mubr.bf16.gmra.mrb[0].mxu0 %v413
    %v564 = vpop.f32.mrb[0].mxu0
    %v565 = vadd.f32 %v355, %v564
    %v566 = vpop.f32.mrb[0].mxu0
    %v567 = vpop.f32.mrb[0].mxu0
    %v568 = vadd.f32 %v355, %v567
    %v569 = vpop.f32.mrb[0].mxu0
    %570 = vmatprep.mubr.bf16.mxu0 0
    %571 = vmatmul.mubr.bf16.gmra.mrb[0].mxu0 %v416
    %v572 = vpop.f32.mrb[0].mxu0
    %v573 = vadd.f32 %v355, %v572
    %v574 = vpop.f32.mrb[0].mxu0
    %v575 = vpop.f32.mrb[0].mxu0
    %v576 = vadd.f32 %v355, %v575
    %v577 = vpop.f32.mrb[0].mxu0
    %578 = vdwg.mxu0
    %v579 = vmax.f32 %v453, 0.0
    %v580 = vmax.f32 %v456, 0.0
    %v581 = vmax.f32 %v461, 0.0
    %v582 = vmax.f32 %v464, 0.0
    %v583 = vmax.f32 %v469, 0.0
    %v584 = vmax.f32 %v472, 0.0
    %v585 = vmax.f32 %v477, 0.0
    %v586 = vmax.f32 %v480, 0.0
    %v587 = vmax.f32 %v485, 0.0
    %v588 = vmax.f32 %v488, 0.0
    %v589 = vmax.f32 %v493, 0.0
    %v590 = vmax.f32 %v496, 0.0
    %v591 = vmax.f32 %v501, 0.0
    %v592 = vmax.f32 %v504, 0.0
    %v593 = vmax.f32 %v509, 0.0
    %v594 = vmax.f32 %v512, 0.0
    %v595 = vmax.f32 %v517, 0.0
    %v596 = vmax.f32 %v520, 0.0
    %v597 = vmax.f32 %v525, 0.0
    %v598 = vmax.f32 %v528, 0.0
    %v599 = vmax.f32 %v533, 0.0
    %v600 = vmax.f32 %v536, 0.0
    %v601 = vmax.f32 %v541, 0.0
    %v602 = vmax.f32 %v544, 0.0
    %v603 = vmax.f32 %v549, 0.0
    %v604 = vmax.f32 %v552, 0.0
    %v605 = vmax.f32 %v557, 0.0
    %v606 = vmax.f32 %v560, 0.0
    %v607 = vmax.f32 %v565, 0.0
    %v608 = vmax.f32 %v568, 0.0
    %v609 = vmax.f32 %v573, 0.0
    %v610 = vmax.f32 %v576, 0.0
    %v611 = vld [vmem:[%s5] sm:$0x1]
    %v613 = vlaneseq
    %v614 = vshrl.u32 %v613, 7
    %v615 = vsub.s32 0, %v614
    %v616 = vrot.slane %v611, %v615
    %v618 = vmul.f32 %v579, %v616
    %v619 = vmul.f32 %v580, %v616
    %v620 = vmul.f32 %v581, %v616
    %v621 = vmul.f32 %v582, %v616
    %v622 = vmul.f32 %v583, %v616
    %v623 = vmul.f32 %v584, %v616
    %v624 = vmul.f32 %v585, %v616
    %v625 = vmul.f32 %v586, %v616
    %v626 = vmul.f32 %v587, %v616
    %v627 = vmul.f32 %v588, %v616
    %v628 = vmul.f32 %v589, %v616
    %v629 = vmul.f32 %v590, %v616
    %v630 = vmul.f32 %v591, %v616
    %v631 = vmul.f32 %v592, %v616
    %v632 = vmul.f32 %v593, %v616
    %v633 = vmul.f32 %v594, %v616
    %v634 = vmul.f32 %v595, %v616
    %v635 = vmul.f32 %v596, %v616
    %v636 = vmul.f32 %v597, %v616
    %v637 = vmul.f32 %v598, %v616
    %v638 = vmul.f32 %v599, %v616
    %v639 = vmul.f32 %v600, %v616
    %v640 = vmul.f32 %v601, %v616
    %v641 = vmul.f32 %v602, %v616
    %v642 = vmul.f32 %v603, %v616
    %v643 = vmul.f32 %v604, %v616
    %v644 = vmul.f32 %v605, %v616
    %v645 = vmul.f32 %v606, %v616
    %v646 = vmul.f32 %v607, %v616
    %v647 = vmul.f32 %v608, %v616
    %v648 = vmul.f32 %v609, %v616
    %v649 = vmul.f32 %v610, %v616
    %v650 = vsel %vm88, %v618, 0.0
    %651 = vadd.xlane.f32.xlu0 %v650
    %v652 = vpop.xlane.xlu0 %651
    %v653 = vsel %vm88, %v619, 0.0
    %654 = vadd.xlane.f32.xlu0 %v653
    %v655 = vpop.xlane.xlu0 %654
    %v656 = vsel %vm88, %v620, 0.0
    %657 = vadd.xlane.f32.xlu0 %v656
    %v658 = vpop.xlane.xlu0 %657
    %v659 = vsel %vm88, %v621, 0.0
    %660 = vadd.xlane.f32.xlu0 %v659
    %v661 = vpop.xlane.xlu0 %660
    %v662 = vsel %vm88, %v622, 0.0
    %663 = vadd.xlane.f32.xlu0 %v662
    %v664 = vpop.xlane.xlu0 %663
    %v665 = vsel %vm88, %v623, 0.0
    %666 = vadd.xlane.f32.xlu0 %v665
    %v667 = vpop.xlane.xlu0 %666
    %v668 = vsel %vm88, %v624, 0.0
    %669 = vadd.xlane.f32.xlu0 %v668
    %v670 = vpop.xlane.xlu0 %669
    %v671 = vsel %vm88, %v625, 0.0
    %672 = vadd.xlane.f32.xlu0 %v671
    %v673 = vpop.xlane.xlu0 %672
    %v674 = vsel %vm88, %v626, 0.0
    %675 = vadd.xlane.f32.xlu0 %v674
    %v676 = vpop.xlane.xlu0 %675
    %v677 = vsel %vm88, %v627, 0.0
    %678 = vadd.xlane.f32.xlu0 %v677
    %v679 = vpop.xlane.xlu0 %678
    %v680 = vsel %vm88, %v628, 0.0
    %681 = vadd.xlane.f32.xlu0 %v680
    %v682 = vpop.xlane.xlu0 %681
    %v683 = vsel %vm88, %v629, 0.0
    %684 = vadd.xlane.f32.xlu0 %v683
    %v685 = vpop.xlane.xlu0 %684
    %v686 = vsel %vm88, %v630, 0.0
    %687 = vadd.xlane.f32.xlu0 %v686
    %v688 = vpop.xlane.xlu0 %687
    %v689 = vsel %vm88, %v631, 0.0
    %690 = vadd.xlane.f32.xlu0 %v689
    %v691 = vpop.xlane.xlu0 %690
    %v692 = vsel %vm88, %v632, 0.0
    %693 = vadd.xlane.f32.xlu0 %v692
    %v694 = vpop.xlane.xlu0 %693
    %v695 = vsel %vm88, %v633, 0.0
    %696 = vadd.xlane.f32.xlu0 %v695
    %v697 = vpop.xlane.xlu0 %696
    %v698 = vsel %vm88, %v634, 0.0
    %699 = vadd.xlane.f32.xlu0 %v698
    %v700 = vpop.xlane.xlu0 %699
    %v701 = vsel %vm88, %v635, 0.0
    %702 = vadd.xlane.f32.xlu0 %v701
    %v703 = vpop.xlane.xlu0 %702
    %v704 = vsel %vm88, %v636, 0.0
    %705 = vadd.xlane.f32.xlu0 %v704
    %v706 = vpop.xlane.xlu0 %705
    %v707 = vsel %vm88, %v637, 0.0
    %708 = vadd.xlane.f32.xlu0 %v707
    %v709 = vpop.xlane.xlu0 %708
    %v710 = vsel %vm88, %v638, 0.0
    %711 = vadd.xlane.f32.xlu0 %v710
    %v712 = vpop.xlane.xlu0 %711
    %v713 = vsel %vm88, %v639, 0.0
    %714 = vadd.xlane.f32.xlu0 %v713
    %v715 = vpop.xlane.xlu0 %714
    %v716 = vsel %vm88, %v640, 0.0
    %717 = vadd.xlane.f32.xlu0 %v716
    %v718 = vpop.xlane.xlu0 %717
    %v719 = vsel %vm88, %v641, 0.0
    %720 = vadd.xlane.f32.xlu0 %v719
    %v721 = vpop.xlane.xlu0 %720
    %v722 = vsel %vm88, %v642, 0.0
    %723 = vadd.xlane.f32.xlu0 %v722
    %v724 = vpop.xlane.xlu0 %723
    %v725 = vsel %vm88, %v643, 0.0
    %726 = vadd.xlane.f32.xlu0 %v725
    %v727 = vpop.xlane.xlu0 %726
    %v728 = vsel %vm88, %v644, 0.0
    %729 = vadd.xlane.f32.xlu0 %v728
    %v730 = vpop.xlane.xlu0 %729
    %v731 = vsel %vm88, %v645, 0.0
    %732 = vadd.xlane.f32.xlu0 %v731
    %v733 = vpop.xlane.xlu0 %732
    %v734 = vsel %vm88, %v646, 0.0
    %735 = vadd.xlane.f32.xlu0 %v734
    %v736 = vpop.xlane.xlu0 %735
    %v737 = vsel %vm88, %v647, 0.0
    %738 = vadd.xlane.f32.xlu0 %v737
    %v739 = vpop.xlane.xlu0 %738
    %v740 = vsel %vm88, %v648, 0.0
    %741 = vadd.xlane.f32.xlu0 %v740
    %v742 = vpop.xlane.xlu0 %741
    %v743 = vsel %vm88, %v649, 0.0
    %744 = vadd.xlane.f32.xlu0 %v743
    %v745 = vpop.xlane.xlu0 %744
    %v778 = vlaneseq
    %v779 = vshrl.u32 %v778, 7
    %v780 = vsub.s32 0, %v779
    %v781 = vrot.slane %v652, %v780
    %v782 = vlaneseq
    %v783 = vshrl.u32 %v782, 7
    %v784 = vsub.s32 1, %v783
    %v785 = vrot.slane %v652, %v784
    %v786 = vlaneseq
    %v787 = vshrl.u32 %v786, 7
    %v788 = vsub.s32 2, %v787
    %v789 = vrot.slane %v652, %v788
    %v790 = vlaneseq
    %v791 = vshrl.u32 %v790, 7
    %v792 = vsub.s32 3, %v791
    %v793 = vrot.slane %v652, %v792
    %v794 = vlaneseq
    %v795 = vshrl.u32 %v794, 7
    %v796 = vsub.s32 4, %v795
    %v797 = vrot.slane %v652, %v796
    %v798 = vlaneseq
    %v799 = vshrl.u32 %v798, 7
    %v800 = vsub.s32 5, %v799
    %v801 = vrot.slane %v652, %v800
    %v802 = vlaneseq
    %v803 = vshrl.u32 %v802, 7
    %v804 = vsub.s32 6, %v803
    %v805 = vrot.slane %v652, %v804
    %v806 = vlaneseq
    %v807 = vshrl.u32 %v806, 7
    %v808 = vsub.s32 7, %v807
    %v809 = vrot.slane %v652, %v808
    %v810 = vlaneseq
    %v811 = vshrl.u32 %v810, 7
    %v812 = vsub.s32 0, %v811
    %v813 = vrot.slane %v655, %v812
    %v814 = vlaneseq
    %v815 = vshrl.u32 %v814, 7
    %v816 = vsub.s32 1, %v815
    %v817 = vrot.slane %v655, %v816
    %v818 = vlaneseq
    %v819 = vshrl.u32 %v818, 7
    %v820 = vsub.s32 2, %v819
    %v821 = vrot.slane %v655, %v820
    %v822 = vlaneseq
    %v823 = vshrl.u32 %v822, 7
    %v824 = vsub.s32 3, %v823
    %v825 = vrot.slane %v655, %v824
    %v826 = vlaneseq
    %v827 = vshrl.u32 %v826, 7
    %v828 = vsub.s32 4, %v827
    %v829 = vrot.slane %v655, %v828
    %v830 = vlaneseq
    %v831 = vshrl.u32 %v830, 7
    %v832 = vsub.s32 5, %v831
    %v833 = vrot.slane %v655, %v832
    %v834 = vlaneseq
    %v835 = vshrl.u32 %v834, 7
    %v836 = vsub.s32 6, %v835
    %v837 = vrot.slane %v655, %v836
    %v838 = vlaneseq
    %v839 = vshrl.u32 %v838, 7
    %v840 = vsub.s32 7, %v839
    %v841 = vrot.slane %v655, %v840
    %v842 = vlaneseq
    %v843 = vshrl.u32 %v842, 7
    %v844 = vsub.s32 0, %v843
    %v845 = vrot.slane %v658, %v844
    %v846 = vlaneseq
    %v847 = vshrl.u32 %v846, 7
    %v848 = vsub.s32 1, %v847
    %v849 = vrot.slane %v658, %v848
    %v850 = vlaneseq
    %v851 = vshrl.u32 %v850, 7
    %v852 = vsub.s32 2, %v851
    %v853 = vrot.slane %v658, %v852
    %v854 = vlaneseq
    %v855 = vshrl.u32 %v854, 7
    %v856 = vsub.s32 3, %v855
    %v857 = vrot.slane %v658, %v856
    %v858 = vlaneseq
    %v859 = vshrl.u32 %v858, 7
    %v860 = vsub.s32 4, %v859
    %v861 = vrot.slane %v658, %v860
    %v862 = vlaneseq
    %v863 = vshrl.u32 %v862, 7
    %v864 = vsub.s32 5, %v863
    %v865 = vrot.slane %v658, %v864
    %v866 = vlaneseq
    %v867 = vshrl.u32 %v866, 7
    %v868 = vsub.s32 6, %v867
    %v869 = vrot.slane %v658, %v868
    %v870 = vlaneseq
    %v871 = vshrl.u32 %v870, 7
    %v872 = vsub.s32 7, %v871
    %v873 = vrot.slane %v658, %v872
    %v874 = vlaneseq
    %v875 = vshrl.u32 %v874, 7
    %v876 = vsub.s32 0, %v875
    %v877 = vrot.slane %v661, %v876
    %v878 = vlaneseq
    %v879 = vshrl.u32 %v878, 7
    %v880 = vsub.s32 1, %v879
    %v881 = vrot.slane %v661, %v880
    %v882 = vlaneseq
    %v883 = vshrl.u32 %v882, 7
    %v884 = vsub.s32 2, %v883
    %v885 = vrot.slane %v661, %v884
    %v886 = vlaneseq
    %v887 = vshrl.u32 %v886, 7
    %v888 = vsub.s32 3, %v887
    %v889 = vrot.slane %v661, %v888
    %v890 = vlaneseq
    %v891 = vshrl.u32 %v890, 7
    %v892 = vsub.s32 4, %v891
    %v893 = vrot.slane %v661, %v892
    %v894 = vlaneseq
    %v895 = vshrl.u32 %v894, 7
    %v896 = vsub.s32 5, %v895
    %v897 = vrot.slane %v661, %v896
    %v898 = vlaneseq
    %v899 = vshrl.u32 %v898, 7
    %v900 = vsub.s32 6, %v899
    %v901 = vrot.slane %v661, %v900
    %v902 = vlaneseq
    %v903 = vshrl.u32 %v902, 7
    %v904 = vsub.s32 7, %v903
    %v905 = vrot.slane %v661, %v904
    %v906 = vlaneseq
    %v907 = vshrl.u32 %v906, 7
    %v908 = vsub.s32 0, %v907
    %v909 = vrot.slane %v664, %v908
    %v910 = vlaneseq
    %v911 = vshrl.u32 %v910, 7
    %v912 = vsub.s32 1, %v911
    %v913 = vrot.slane %v664, %v912
    %v914 = vlaneseq
    %v915 = vshrl.u32 %v914, 7
    %v916 = vsub.s32 2, %v915
    %v917 = vrot.slane %v664, %v916
    %v918 = vlaneseq
    %v919 = vshrl.u32 %v918, 7
    %v920 = vsub.s32 3, %v919
    %v921 = vrot.slane %v664, %v920
    %v922 = vlaneseq
    %v923 = vshrl.u32 %v922, 7
    %v924 = vsub.s32 4, %v923
    %v925 = vrot.slane %v664, %v924
    %v926 = vlaneseq
    %v927 = vshrl.u32 %v926, 7
    %v928 = vsub.s32 5, %v927
    %v929 = vrot.slane %v664, %v928
    %v930 = vlaneseq
    %v931 = vshrl.u32 %v930, 7
    %v932 = vsub.s32 6, %v931
    %v933 = vrot.slane %v664, %v932
    %v934 = vlaneseq
    %v935 = vshrl.u32 %v934, 7
    %v936 = vsub.s32 7, %v935
    %v937 = vrot.slane %v664, %v936
    %v938 = vlaneseq
    %v939 = vshrl.u32 %v938, 7
    %v940 = vsub.s32 0, %v939
    %v941 = vrot.slane %v667, %v940
    %v942 = vlaneseq
    %v943 = vshrl.u32 %v942, 7
    %v944 = vsub.s32 1, %v943
    %v945 = vrot.slane %v667, %v944
    %v946 = vlaneseq
    %v947 = vshrl.u32 %v946, 7
    %v948 = vsub.s32 2, %v947
    %v949 = vrot.slane %v667, %v948
    %v950 = vlaneseq
    %v951 = vshrl.u32 %v950, 7
    %v952 = vsub.s32 3, %v951
    %v953 = vrot.slane %v667, %v952
    %v954 = vlaneseq
    %v955 = vshrl.u32 %v954, 7
    %v956 = vsub.s32 4, %v955
    %v957 = vrot.slane %v667, %v956
    %v958 = vlaneseq
    %v959 = vshrl.u32 %v958, 7
    %v960 = vsub.s32 5, %v959
    %v961 = vrot.slane %v667, %v960
    %v962 = vlaneseq
    %v963 = vshrl.u32 %v962, 7
    %v964 = vsub.s32 6, %v963
    %v965 = vrot.slane %v667, %v964
    %v966 = vlaneseq
    %v967 = vshrl.u32 %v966, 7
    %v968 = vsub.s32 7, %v967
    %v969 = vrot.slane %v667, %v968
    %v970 = vlaneseq
    %v971 = vshrl.u32 %v970, 7
    %v972 = vsub.s32 0, %v971
    %v973 = vrot.slane %v670, %v972
    %v974 = vlaneseq
    %v975 = vshrl.u32 %v974, 7
    %v976 = vsub.s32 1, %v975
    %v977 = vrot.slane %v670, %v976
    %v978 = vlaneseq
    %v979 = vshrl.u32 %v978, 7
    %v980 = vsub.s32 2, %v979
    %v981 = vrot.slane %v670, %v980
    %v982 = vlaneseq
    %v983 = vshrl.u32 %v982, 7
    %v984 = vsub.s32 3, %v983
    %v985 = vrot.slane %v670, %v984
    %v986 = vlaneseq
    %v987 = vshrl.u32 %v986, 7
    %v988 = vsub.s32 4, %v987
    %v989 = vrot.slane %v670, %v988
    %v990 = vlaneseq
    %v991 = vshrl.u32 %v990, 7
    %v992 = vsub.s32 5, %v991
    %v993 = vrot.slane %v670, %v992
    %v994 = vlaneseq
    %v995 = vshrl.u32 %v994, 7
    %v996 = vsub.s32 6, %v995
    %v997 = vrot.slane %v670, %v996
    %v998 = vlaneseq
    %v999 = vshrl.u32 %v998, 7
    %v1000 = vsub.s32 7, %v999
    %v1001 = vrot.slane %v670, %v1000
    %v1002 = vlaneseq
    %v1003 = vshrl.u32 %v1002, 7
    %v1004 = vsub.s32 0, %v1003
    %v1005 = vrot.slane %v673, %v1004
    %v1006 = vlaneseq
    %v1007 = vshrl.u32 %v1006, 7
    %v1008 = vsub.s32 1, %v1007
    %v1009 = vrot.slane %v673, %v1008
    %v1010 = vlaneseq
    %v1011 = vshrl.u32 %v1010, 7
    %v1012 = vsub.s32 2, %v1011
    %v1013 = vrot.slane %v673, %v1012
    %v1014 = vlaneseq
    %v1015 = vshrl.u32 %v1014, 7
    %v1016 = vsub.s32 3, %v1015
    %v1017 = vrot.slane %v673, %v1016
    %v1018 = vlaneseq
    %v1019 = vshrl.u32 %v1018, 7
    %v1020 = vsub.s32 4, %v1019
    %v1021 = vrot.slane %v673, %v1020
    %v1022 = vlaneseq
    %v1023 = vshrl.u32 %v1022, 7
    %v1024 = vsub.s32 5, %v1023
    %v1025 = vrot.slane %v673, %v1024
    %v1026 = vlaneseq
    %v1027 = vshrl.u32 %v1026, 7
    %v1028 = vsub.s32 6, %v1027
    %v1029 = vrot.slane %v673, %v1028
    %v1030 = vlaneseq
    %v1031 = vshrl.u32 %v1030, 7
    %v1032 = vsub.s32 7, %v1031
    %v1033 = vrot.slane %v673, %v1032
    %v1034 = vlaneseq
    %v1035 = vshrl.u32 %v1034, 7
    %v1036 = vsub.s32 0, %v1035
    %v1037 = vrot.slane %v676, %v1036
    %v1038 = vlaneseq
    %v1039 = vshrl.u32 %v1038, 7
    %v1040 = vsub.s32 1, %v1039
    %v1041 = vrot.slane %v676, %v1040
    %v1042 = vlaneseq
    %v1043 = vshrl.u32 %v1042, 7
    %v1044 = vsub.s32 2, %v1043
    %v1045 = vrot.slane %v676, %v1044
    %v1046 = vlaneseq
    %v1047 = vshrl.u32 %v1046, 7
    %v1048 = vsub.s32 3, %v1047
    %v1049 = vrot.slane %v676, %v1048
    %v1050 = vlaneseq
    %v1051 = vshrl.u32 %v1050, 7
    %v1052 = vsub.s32 4, %v1051
    %v1053 = vrot.slane %v676, %v1052
    %v1054 = vlaneseq
    %v1055 = vshrl.u32 %v1054, 7
    %v1056 = vsub.s32 5, %v1055
    %v1057 = vrot.slane %v676, %v1056
    %v1058 = vlaneseq
    %v1059 = vshrl.u32 %v1058, 7
    %v1060 = vsub.s32 6, %v1059
    %v1061 = vrot.slane %v676, %v1060
    %v1062 = vlaneseq
    %v1063 = vshrl.u32 %v1062, 7
    %v1064 = vsub.s32 7, %v1063
    %v1065 = vrot.slane %v676, %v1064
    %v1066 = vlaneseq
    %v1067 = vshrl.u32 %v1066, 7
    %v1068 = vsub.s32 0, %v1067
    %v1069 = vrot.slane %v679, %v1068
    %v1070 = vlaneseq
    %v1071 = vshrl.u32 %v1070, 7
    %v1072 = vsub.s32 1, %v1071
    %v1073 = vrot.slane %v679, %v1072
    %v1074 = vlaneseq
    %v1075 = vshrl.u32 %v1074, 7
    %v1076 = vsub.s32 2, %v1075
    %v1077 = vrot.slane %v679, %v1076
    %v1078 = vlaneseq
    %v1079 = vshrl.u32 %v1078, 7
    %v1080 = vsub.s32 3, %v1079
    %v1081 = vrot.slane %v679, %v1080
    %v1082 = vlaneseq
    %v1083 = vshrl.u32 %v1082, 7
    %v1084 = vsub.s32 4, %v1083
    %v1085 = vrot.slane %v679, %v1084
    %v1086 = vlaneseq
    %v1087 = vshrl.u32 %v1086, 7
    %v1088 = vsub.s32 5, %v1087
    %v1089 = vrot.slane %v679, %v1088
    %v1090 = vlaneseq
    %v1091 = vshrl.u32 %v1090, 7
    %v1092 = vsub.s32 6, %v1091
    %v1093 = vrot.slane %v679, %v1092
    %v1094 = vlaneseq
    %v1095 = vshrl.u32 %v1094, 7
    %v1096 = vsub.s32 7, %v1095
    %v1097 = vrot.slane %v679, %v1096
    %v1098 = vlaneseq
    %v1099 = vshrl.u32 %v1098, 7
    %v1100 = vsub.s32 0, %v1099
    %v1101 = vrot.slane %v682, %v1100
    %v1102 = vlaneseq
    %v1103 = vshrl.u32 %v1102, 7
    %v1104 = vsub.s32 1, %v1103
    %v1105 = vrot.slane %v682, %v1104
    %v1106 = vlaneseq
    %v1107 = vshrl.u32 %v1106, 7
    %v1108 = vsub.s32 2, %v1107
    %v1109 = vrot.slane %v682, %v1108
    %v1110 = vlaneseq
    %v1111 = vshrl.u32 %v1110, 7
    %v1112 = vsub.s32 3, %v1111
    %v1113 = vrot.slane %v682, %v1112
    %v1114 = vlaneseq
    %v1115 = vshrl.u32 %v1114, 7
    %v1116 = vsub.s32 4, %v1115
    %v1117 = vrot.slane %v682, %v1116
    %v1118 = vlaneseq
    %v1119 = vshrl.u32 %v1118, 7
    %v1120 = vsub.s32 5, %v1119
    %v1121 = vrot.slane %v682, %v1120
    %v1122 = vlaneseq
    %v1123 = vshrl.u32 %v1122, 7
    %v1124 = vsub.s32 6, %v1123
    %v1125 = vrot.slane %v682, %v1124
    %v1126 = vlaneseq
    %v1127 = vshrl.u32 %v1126, 7
    %v1128 = vsub.s32 7, %v1127
    %v1129 = vrot.slane %v682, %v1128
    %v1130 = vlaneseq
    %v1131 = vshrl.u32 %v1130, 7
    %v1132 = vsub.s32 0, %v1131
    %v1133 = vrot.slane %v685, %v1132
    %v1134 = vlaneseq
    %v1135 = vshrl.u32 %v1134, 7
    %v1136 = vsub.s32 1, %v1135
    %v1137 = vrot.slane %v685, %v1136
    %v1138 = vlaneseq
    %v1139 = vshrl.u32 %v1138, 7
    %v1140 = vsub.s32 2, %v1139
    %v1141 = vrot.slane %v685, %v1140
    %v1142 = vlaneseq
    %v1143 = vshrl.u32 %v1142, 7
    %v1144 = vsub.s32 3, %v1143
    %v1145 = vrot.slane %v685, %v1144
    %v1146 = vlaneseq
    %v1147 = vshrl.u32 %v1146, 7
    %v1148 = vsub.s32 4, %v1147
    %v1149 = vrot.slane %v685, %v1148
    %v1150 = vlaneseq
    %v1151 = vshrl.u32 %v1150, 7
    %v1152 = vsub.s32 5, %v1151
    %v1153 = vrot.slane %v685, %v1152
    %v1154 = vlaneseq
    %v1155 = vshrl.u32 %v1154, 7
    %v1156 = vsub.s32 6, %v1155
    %v1157 = vrot.slane %v685, %v1156
    %v1158 = vlaneseq
    %v1159 = vshrl.u32 %v1158, 7
    %v1160 = vsub.s32 7, %v1159
    %v1161 = vrot.slane %v685, %v1160
    %v1162 = vlaneseq
    %v1163 = vshrl.u32 %v1162, 7
    %v1164 = vsub.s32 0, %v1163
    %v1165 = vrot.slane %v688, %v1164
    %v1166 = vlaneseq
    %v1167 = vshrl.u32 %v1166, 7
    %v1168 = vsub.s32 1, %v1167
    %v1169 = vrot.slane %v688, %v1168
    %v1170 = vlaneseq
    %v1171 = vshrl.u32 %v1170, 7
    %v1172 = vsub.s32 2, %v1171
    %v1173 = vrot.slane %v688, %v1172
    %v1174 = vlaneseq
    %v1175 = vshrl.u32 %v1174, 7
    %v1176 = vsub.s32 3, %v1175
    %v1177 = vrot.slane %v688, %v1176
    %v1178 = vlaneseq
    %v1179 = vshrl.u32 %v1178, 7
    %v1180 = vsub.s32 4, %v1179
    %v1181 = vrot.slane %v688, %v1180
    %v1182 = vlaneseq
    %v1183 = vshrl.u32 %v1182, 7
    %v1184 = vsub.s32 5, %v1183
    %v1185 = vrot.slane %v688, %v1184
    %v1186 = vlaneseq
    %v1187 = vshrl.u32 %v1186, 7
    %v1188 = vsub.s32 6, %v1187
    %v1189 = vrot.slane %v688, %v1188
    %v1190 = vlaneseq
    %v1191 = vshrl.u32 %v1190, 7
    %v1192 = vsub.s32 7, %v1191
    %v1193 = vrot.slane %v688, %v1192
    %v1194 = vlaneseq
    %v1195 = vshrl.u32 %v1194, 7
    %v1196 = vsub.s32 0, %v1195
    %v1197 = vrot.slane %v691, %v1196
    %v1198 = vlaneseq
    %v1199 = vshrl.u32 %v1198, 7
    %v1200 = vsub.s32 1, %v1199
    %v1201 = vrot.slane %v691, %v1200
    %v1202 = vlaneseq
    %v1203 = vshrl.u32 %v1202, 7
    %v1204 = vsub.s32 2, %v1203
    %v1205 = vrot.slane %v691, %v1204
    %v1206 = vlaneseq
    %v1207 = vshrl.u32 %v1206, 7
    %v1208 = vsub.s32 3, %v1207
    %v1209 = vrot.slane %v691, %v1208
    %v1210 = vlaneseq
    %v1211 = vshrl.u32 %v1210, 7
    %v1212 = vsub.s32 4, %v1211
    %v1213 = vrot.slane %v691, %v1212
    %v1214 = vlaneseq
    %v1215 = vshrl.u32 %v1214, 7
    %v1216 = vsub.s32 5, %v1215
    %v1217 = vrot.slane %v691, %v1216
    %v1218 = vlaneseq
    %v1219 = vshrl.u32 %v1218, 7
    %v1220 = vsub.s32 6, %v1219
    %v1221 = vrot.slane %v691, %v1220
    %v1222 = vlaneseq
    %v1223 = vshrl.u32 %v1222, 7
    %v1224 = vsub.s32 7, %v1223
    %v1225 = vrot.slane %v691, %v1224
    %v1226 = vlaneseq
    %v1227 = vshrl.u32 %v1226, 7
    %v1228 = vsub.s32 0, %v1227
    %v1229 = vrot.slane %v694, %v1228
    %v1230 = vlaneseq
    %v1231 = vshrl.u32 %v1230, 7
    %v1232 = vsub.s32 1, %v1231
    %v1233 = vrot.slane %v694, %v1232
    %v1234 = vlaneseq
    %v1235 = vshrl.u32 %v1234, 7
    %v1236 = vsub.s32 2, %v1235
    %v1237 = vrot.slane %v694, %v1236
    %v1238 = vlaneseq
    %v1239 = vshrl.u32 %v1238, 7
    %v1240 = vsub.s32 3, %v1239
    %v1241 = vrot.slane %v694, %v1240
    %v1242 = vlaneseq
    %v1243 = vshrl.u32 %v1242, 7
    %v1244 = vsub.s32 4, %v1243
    %v1245 = vrot.slane %v694, %v1244
    %v1246 = vlaneseq
    %v1247 = vshrl.u32 %v1246, 7
    %v1248 = vsub.s32 5, %v1247
    %v1249 = vrot.slane %v694, %v1248
    %v1250 = vlaneseq
    %v1251 = vshrl.u32 %v1250, 7
    %v1252 = vsub.s32 6, %v1251
    %v1253 = vrot.slane %v694, %v1252
    %v1254 = vlaneseq
    %v1255 = vshrl.u32 %v1254, 7
    %v1256 = vsub.s32 7, %v1255
    %v1257 = vrot.slane %v694, %v1256
    %v1258 = vlaneseq
    %v1259 = vshrl.u32 %v1258, 7
    %v1260 = vsub.s32 0, %v1259
    %v1261 = vrot.slane %v697, %v1260
    %v1262 = vlaneseq
    %v1263 = vshrl.u32 %v1262, 7
    %v1264 = vsub.s32 1, %v1263
    %v1265 = vrot.slane %v697, %v1264
    %v1266 = vlaneseq
    %v1267 = vshrl.u32 %v1266, 7
    %v1268 = vsub.s32 2, %v1267
    %v1269 = vrot.slane %v697, %v1268
    %v1270 = vlaneseq
    %v1271 = vshrl.u32 %v1270, 7
    %v1272 = vsub.s32 3, %v1271
    %v1273 = vrot.slane %v697, %v1272
    %v1274 = vlaneseq
    %v1275 = vshrl.u32 %v1274, 7
    %v1276 = vsub.s32 4, %v1275
    %v1277 = vrot.slane %v697, %v1276
    %v1278 = vlaneseq
    %v1279 = vshrl.u32 %v1278, 7
    %v1280 = vsub.s32 5, %v1279
    %v1281 = vrot.slane %v697, %v1280
    %v1282 = vlaneseq
    %v1283 = vshrl.u32 %v1282, 7
    %v1284 = vsub.s32 6, %v1283
    %v1285 = vrot.slane %v697, %v1284
    %v1286 = vlaneseq
    %v1287 = vshrl.u32 %v1286, 7
    %v1288 = vsub.s32 7, %v1287
    %v1289 = vrot.slane %v697, %v1288
    %v1290 = vlaneseq
    %v1291 = vshrl.u32 %v1290, 7
    %v1292 = vsub.s32 0, %v1291
    %v1293 = vrot.slane %v700, %v1292
    %v1294 = vlaneseq
    %v1295 = vshrl.u32 %v1294, 7
    %v1296 = vsub.s32 1, %v1295
    %v1297 = vrot.slane %v700, %v1296
    %v1298 = vlaneseq
    %v1299 = vshrl.u32 %v1298, 7
    %v1300 = vsub.s32 2, %v1299
    %v1301 = vrot.slane %v700, %v1300
    %v1302 = vlaneseq
    %v1303 = vshrl.u32 %v1302, 7
    %v1304 = vsub.s32 3, %v1303
    %v1305 = vrot.slane %v700, %v1304
    %v1306 = vlaneseq
    %v1307 = vshrl.u32 %v1306, 7
    %v1308 = vsub.s32 4, %v1307
    %v1309 = vrot.slane %v700, %v1308
    %v1310 = vlaneseq
    %v1311 = vshrl.u32 %v1310, 7
    %v1312 = vsub.s32 5, %v1311
    %v1313 = vrot.slane %v700, %v1312
    %v1314 = vlaneseq
    %v1315 = vshrl.u32 %v1314, 7
    %v1316 = vsub.s32 6, %v1315
    %v1317 = vrot.slane %v700, %v1316
    %v1318 = vlaneseq
    %v1319 = vshrl.u32 %v1318, 7
    %v1320 = vsub.s32 7, %v1319
    %v1321 = vrot.slane %v700, %v1320
    %v1322 = vlaneseq
    %v1323 = vshrl.u32 %v1322, 7
    %v1324 = vsub.s32 0, %v1323
    %v1325 = vrot.slane %v703, %v1324
    %v1326 = vlaneseq
    %v1327 = vshrl.u32 %v1326, 7
    %v1328 = vsub.s32 1, %v1327
    %v1329 = vrot.slane %v703, %v1328
    %v1330 = vlaneseq
    %v1331 = vshrl.u32 %v1330, 7
    %v1332 = vsub.s32 2, %v1331
    %v1333 = vrot.slane %v703, %v1332
    %v1334 = vlaneseq
    %v1335 = vshrl.u32 %v1334, 7
    %v1336 = vsub.s32 3, %v1335
    %v1337 = vrot.slane %v703, %v1336
    %v1338 = vlaneseq
    %v1339 = vshrl.u32 %v1338, 7
    %v1340 = vsub.s32 4, %v1339
    %v1341 = vrot.slane %v703, %v1340
    %v1342 = vlaneseq
    %v1343 = vshrl.u32 %v1342, 7
    %v1344 = vsub.s32 5, %v1343
    %v1345 = vrot.slane %v703, %v1344
    %v1346 = vlaneseq
    %v1347 = vshrl.u32 %v1346, 7
    %v1348 = vsub.s32 6, %v1347
    %v1349 = vrot.slane %v703, %v1348
    %v1350 = vlaneseq
    %v1351 = vshrl.u32 %v1350, 7
    %v1352 = vsub.s32 7, %v1351
    %v1353 = vrot.slane %v703, %v1352
    %v1354 = vlaneseq
    %v1355 = vshrl.u32 %v1354, 7
    %v1356 = vsub.s32 0, %v1355
    %v1357 = vrot.slane %v706, %v1356
    %v1358 = vlaneseq
    %v1359 = vshrl.u32 %v1358, 7
    %v1360 = vsub.s32 1, %v1359
    %v1361 = vrot.slane %v706, %v1360
    %v1362 = vlaneseq
    %v1363 = vshrl.u32 %v1362, 7
    %v1364 = vsub.s32 2, %v1363
    %v1365 = vrot.slane %v706, %v1364
    %v1366 = vlaneseq
    %v1367 = vshrl.u32 %v1366, 7
    %v1368 = vsub.s32 3, %v1367
    %v1369 = vrot.slane %v706, %v1368
    %v1370 = vlaneseq
    %v1371 = vshrl.u32 %v1370, 7
    %v1372 = vsub.s32 4, %v1371
    %v1373 = vrot.slane %v706, %v1372
    %v1374 = vlaneseq
    %v1375 = vshrl.u32 %v1374, 7
    %v1376 = vsub.s32 5, %v1375
    %v1377 = vrot.slane %v706, %v1376
    %v1378 = vlaneseq
    %v1379 = vshrl.u32 %v1378, 7
    %v1380 = vsub.s32 6, %v1379
    %v1381 = vrot.slane %v706, %v1380
    %v1382 = vlaneseq
    %v1383 = vshrl.u32 %v1382, 7
    %v1384 = vsub.s32 7, %v1383
    %v1385 = vrot.slane %v706, %v1384
    %v1386 = vlaneseq
    %v1387 = vshrl.u32 %v1386, 7
    %v1388 = vsub.s32 0, %v1387
    %v1389 = vrot.slane %v709, %v1388
    %v1390 = vlaneseq
    %v1391 = vshrl.u32 %v1390, 7
    %v1392 = vsub.s32 1, %v1391
    %v1393 = vrot.slane %v709, %v1392
    %v1394 = vlaneseq
    %v1395 = vshrl.u32 %v1394, 7
    %v1396 = vsub.s32 2, %v1395
    %v1397 = vrot.slane %v709, %v1396
    %v1398 = vlaneseq
    %v1399 = vshrl.u32 %v1398, 7
    %v1400 = vsub.s32 3, %v1399
    %v1401 = vrot.slane %v709, %v1400
    %v1402 = vlaneseq
    %v1403 = vshrl.u32 %v1402, 7
    %v1404 = vsub.s32 4, %v1403
    %v1405 = vrot.slane %v709, %v1404
    %v1406 = vlaneseq
    %v1407 = vshrl.u32 %v1406, 7
    %v1408 = vsub.s32 5, %v1407
    %v1409 = vrot.slane %v709, %v1408
    %v1410 = vlaneseq
    %v1411 = vshrl.u32 %v1410, 7
    %v1412 = vsub.s32 6, %v1411
    %v1413 = vrot.slane %v709, %v1412
    %v1414 = vlaneseq
    %v1415 = vshrl.u32 %v1414, 7
    %v1416 = vsub.s32 7, %v1415
    %v1417 = vrot.slane %v709, %v1416
    %v1418 = vlaneseq
    %v1419 = vshrl.u32 %v1418, 7
    %v1420 = vsub.s32 0, %v1419
    %v1421 = vrot.slane %v712, %v1420
    %v1422 = vlaneseq
    %v1423 = vshrl.u32 %v1422, 7
    %v1424 = vsub.s32 1, %v1423
    %v1425 = vrot.slane %v712, %v1424
    %v1426 = vlaneseq
    %v1427 = vshrl.u32 %v1426, 7
    %v1428 = vsub.s32 2, %v1427
    %v1429 = vrot.slane %v712, %v1428
    %v1430 = vlaneseq
    %v1431 = vshrl.u32 %v1430, 7
    %v1432 = vsub.s32 3, %v1431
    %v1433 = vrot.slane %v712, %v1432
    %v1434 = vlaneseq
    %v1435 = vshrl.u32 %v1434, 7
    %v1436 = vsub.s32 4, %v1435
    %v1437 = vrot.slane %v712, %v1436
    %v1438 = vlaneseq
    %v1439 = vshrl.u32 %v1438, 7
    %v1440 = vsub.s32 5, %v1439
    %v1441 = vrot.slane %v712, %v1440
    %v1442 = vlaneseq
    %v1443 = vshrl.u32 %v1442, 7
    %v1444 = vsub.s32 6, %v1443
    %v1445 = vrot.slane %v712, %v1444
    %v1446 = vlaneseq
    %v1447 = vshrl.u32 %v1446, 7
    %v1448 = vsub.s32 7, %v1447
    %v1449 = vrot.slane %v712, %v1448
    %v1450 = vlaneseq
    %v1451 = vshrl.u32 %v1450, 7
    %v1452 = vsub.s32 0, %v1451
    %v1453 = vrot.slane %v715, %v1452
    %v1454 = vlaneseq
    %v1455 = vshrl.u32 %v1454, 7
    %v1456 = vsub.s32 1, %v1455
    %v1457 = vrot.slane %v715, %v1456
    %v1458 = vlaneseq
    %v1459 = vshrl.u32 %v1458, 7
    %v1460 = vsub.s32 2, %v1459
    %v1461 = vrot.slane %v715, %v1460
    %v1462 = vlaneseq
    %v1463 = vshrl.u32 %v1462, 7
    %v1464 = vsub.s32 3, %v1463
    %v1465 = vrot.slane %v715, %v1464
    %v1466 = vlaneseq
    %v1467 = vshrl.u32 %v1466, 7
    %v1468 = vsub.s32 4, %v1467
    %v1469 = vrot.slane %v715, %v1468
    %v1470 = vlaneseq
    %v1471 = vshrl.u32 %v1470, 7
    %v1472 = vsub.s32 5, %v1471
    %v1473 = vrot.slane %v715, %v1472
    %v1474 = vlaneseq
    %v1475 = vshrl.u32 %v1474, 7
    %v1476 = vsub.s32 6, %v1475
    %v1477 = vrot.slane %v715, %v1476
    %v1478 = vlaneseq
    %v1479 = vshrl.u32 %v1478, 7
    %v1480 = vsub.s32 7, %v1479
    %v1481 = vrot.slane %v715, %v1480
    %v1482 = vlaneseq
    %v1483 = vshrl.u32 %v1482, 7
    %v1484 = vsub.s32 0, %v1483
    %v1485 = vrot.slane %v718, %v1484
    %v1486 = vlaneseq
    %v1487 = vshrl.u32 %v1486, 7
    %v1488 = vsub.s32 1, %v1487
    %v1489 = vrot.slane %v718, %v1488
    %v1490 = vlaneseq
    %v1491 = vshrl.u32 %v1490, 7
    %v1492 = vsub.s32 2, %v1491
    %v1493 = vrot.slane %v718, %v1492
    %v1494 = vlaneseq
    %v1495 = vshrl.u32 %v1494, 7
    %v1496 = vsub.s32 3, %v1495
    %v1497 = vrot.slane %v718, %v1496
    %v1498 = vlaneseq
    %v1499 = vshrl.u32 %v1498, 7
    %v1500 = vsub.s32 4, %v1499
    %v1501 = vrot.slane %v718, %v1500
    %v1502 = vlaneseq
    %v1503 = vshrl.u32 %v1502, 7
    %v1504 = vsub.s32 5, %v1503
    %v1505 = vrot.slane %v718, %v1504
    %v1506 = vlaneseq
    %v1507 = vshrl.u32 %v1506, 7
    %v1508 = vsub.s32 6, %v1507
    %v1509 = vrot.slane %v718, %v1508
    %v1510 = vlaneseq
    %v1511 = vshrl.u32 %v1510, 7
    %v1512 = vsub.s32 7, %v1511
    %v1513 = vrot.slane %v718, %v1512
    %v1514 = vlaneseq
    %v1515 = vshrl.u32 %v1514, 7
    %v1516 = vsub.s32 0, %v1515
    %v1517 = vrot.slane %v721, %v1516
    %v1518 = vlaneseq
    %v1519 = vshrl.u32 %v1518, 7
    %v1520 = vsub.s32 1, %v1519
    %v1521 = vrot.slane %v721, %v1520
    %v1522 = vlaneseq
    %v1523 = vshrl.u32 %v1522, 7
    %v1524 = vsub.s32 2, %v1523
    %v1525 = vrot.slane %v721, %v1524
    %v1526 = vlaneseq
    %v1527 = vshrl.u32 %v1526, 7
    %v1528 = vsub.s32 3, %v1527
    %v1529 = vrot.slane %v721, %v1528
    %v1530 = vlaneseq
    %v1531 = vshrl.u32 %v1530, 7
    %v1532 = vsub.s32 4, %v1531
    %v1533 = vrot.slane %v721, %v1532
    %v1534 = vlaneseq
    %v1535 = vshrl.u32 %v1534, 7
    %v1536 = vsub.s32 5, %v1535
    %v1537 = vrot.slane %v721, %v1536
    %v1538 = vlaneseq
    %v1539 = vshrl.u32 %v1538, 7
    %v1540 = vsub.s32 6, %v1539
    %v1541 = vrot.slane %v721, %v1540
    %v1542 = vlaneseq
    %v1543 = vshrl.u32 %v1542, 7
    %v1544 = vsub.s32 7, %v1543
    %v1545 = vrot.slane %v721, %v1544
    %v1546 = vlaneseq
    %v1547 = vshrl.u32 %v1546, 7
    %v1548 = vsub.s32 0, %v1547
    %v1549 = vrot.slane %v724, %v1548
    %v1550 = vlaneseq
    %v1551 = vshrl.u32 %v1550, 7
    %v1552 = vsub.s32 1, %v1551
    %v1553 = vrot.slane %v724, %v1552
    %v1554 = vlaneseq
    %v1555 = vshrl.u32 %v1554, 7
    %v1556 = vsub.s32 2, %v1555
    %v1557 = vrot.slane %v724, %v1556
    %v1558 = vlaneseq
    %v1559 = vshrl.u32 %v1558, 7
    %v1560 = vsub.s32 3, %v1559
    %v1561 = vrot.slane %v724, %v1560
    %v1562 = vlaneseq
    %v1563 = vshrl.u32 %v1562, 7
    %v1564 = vsub.s32 4, %v1563
    %v1565 = vrot.slane %v724, %v1564
    %v1566 = vlaneseq
    %v1567 = vshrl.u32 %v1566, 7
    %v1568 = vsub.s32 5, %v1567
    %v1569 = vrot.slane %v724, %v1568
    %v1570 = vlaneseq
    %v1571 = vshrl.u32 %v1570, 7
    %v1572 = vsub.s32 6, %v1571
    %v1573 = vrot.slane %v724, %v1572
    %v1574 = vlaneseq
    %v1575 = vshrl.u32 %v1574, 7
    %v1576 = vsub.s32 7, %v1575
    %v1577 = vrot.slane %v724, %v1576
    %v1578 = vlaneseq
    %v1579 = vshrl.u32 %v1578, 7
    %v1580 = vsub.s32 0, %v1579
    %v1581 = vrot.slane %v727, %v1580
    %v1582 = vlaneseq
    %v1583 = vshrl.u32 %v1582, 7
    %v1584 = vsub.s32 1, %v1583
    %v1585 = vrot.slane %v727, %v1584
    %v1586 = vlaneseq
    %v1587 = vshrl.u32 %v1586, 7
    %v1588 = vsub.s32 2, %v1587
    %v1589 = vrot.slane %v727, %v1588
    %v1590 = vlaneseq
    %v1591 = vshrl.u32 %v1590, 7
    %v1592 = vsub.s32 3, %v1591
    %v1593 = vrot.slane %v727, %v1592
    %v1594 = vlaneseq
    %v1595 = vshrl.u32 %v1594, 7
    %v1596 = vsub.s32 4, %v1595
    %v1597 = vrot.slane %v727, %v1596
    %v1598 = vlaneseq
    %v1599 = vshrl.u32 %v1598, 7
    %v1600 = vsub.s32 5, %v1599
    %v1601 = vrot.slane %v727, %v1600
    %v1602 = vlaneseq
    %v1603 = vshrl.u32 %v1602, 7
    %v1604 = vsub.s32 6, %v1603
    %v1605 = vrot.slane %v727, %v1604
    %v1606 = vlaneseq
    %v1607 = vshrl.u32 %v1606, 7
    %v1608 = vsub.s32 7, %v1607
    %v1609 = vrot.slane %v727, %v1608
    %v1610 = vlaneseq
    %v1611 = vshrl.u32 %v1610, 7
    %v1612 = vsub.s32 0, %v1611
    %v1613 = vrot.slane %v730, %v1612
    %v1614 = vlaneseq
    %v1615 = vshrl.u32 %v1614, 7
    %v1616 = vsub.s32 1, %v1615
    %v1617 = vrot.slane %v730, %v1616
    %v1618 = vlaneseq
    %v1619 = vshrl.u32 %v1618, 7
    %v1620 = vsub.s32 2, %v1619
    %v1621 = vrot.slane %v730, %v1620
    %v1622 = vlaneseq
    %v1623 = vshrl.u32 %v1622, 7
    %v1624 = vsub.s32 3, %v1623
    %v1625 = vrot.slane %v730, %v1624
    %v1626 = vlaneseq
    %v1627 = vshrl.u32 %v1626, 7
    %v1628 = vsub.s32 4, %v1627
    %v1629 = vrot.slane %v730, %v1628
    %v1630 = vlaneseq
    %v1631 = vshrl.u32 %v1630, 7
    %v1632 = vsub.s32 5, %v1631
    %v1633 = vrot.slane %v730, %v1632
    %v1634 = vlaneseq
    %v1635 = vshrl.u32 %v1634, 7
    %v1636 = vsub.s32 6, %v1635
    %v1637 = vrot.slane %v730, %v1636
    %v1638 = vlaneseq
    %v1639 = vshrl.u32 %v1638, 7
    %v1640 = vsub.s32 7, %v1639
    %v1641 = vrot.slane %v730, %v1640
    %v1642 = vlaneseq
    %v1643 = vshrl.u32 %v1642, 7
    %v1644 = vsub.s32 0, %v1643
    %v1645 = vrot.slane %v733, %v1644
    %v1646 = vlaneseq
    %v1647 = vshrl.u32 %v1646, 7
    %v1648 = vsub.s32 1, %v1647
    %v1649 = vrot.slane %v733, %v1648
    %v1650 = vlaneseq
    %v1651 = vshrl.u32 %v1650, 7
    %v1652 = vsub.s32 2, %v1651
    %v1653 = vrot.slane %v733, %v1652
    %v1654 = vlaneseq
    %v1655 = vshrl.u32 %v1654, 7
    %v1656 = vsub.s32 3, %v1655
    %v1657 = vrot.slane %v733, %v1656
    %v1658 = vlaneseq
    %v1659 = vshrl.u32 %v1658, 7
    %v1660 = vsub.s32 4, %v1659
    %v1661 = vrot.slane %v733, %v1660
    %v1662 = vlaneseq
    %v1663 = vshrl.u32 %v1662, 7
    %v1664 = vsub.s32 5, %v1663
    %v1665 = vrot.slane %v733, %v1664
    %v1666 = vlaneseq
    %v1667 = vshrl.u32 %v1666, 7
    %v1668 = vsub.s32 6, %v1667
    %v1669 = vrot.slane %v733, %v1668
    %v1670 = vlaneseq
    %v1671 = vshrl.u32 %v1670, 7
    %v1672 = vsub.s32 7, %v1671
    %v1673 = vrot.slane %v733, %v1672
    %v1674 = vlaneseq
    %v1675 = vshrl.u32 %v1674, 7
    %v1676 = vsub.s32 0, %v1675
    %v1677 = vrot.slane %v736, %v1676
    %v1678 = vlaneseq
    %v1679 = vshrl.u32 %v1678, 7
    %v1680 = vsub.s32 1, %v1679
    %v1681 = vrot.slane %v736, %v1680
    %v1682 = vlaneseq
    %v1683 = vshrl.u32 %v1682, 7
    %v1684 = vsub.s32 2, %v1683
    %v1685 = vrot.slane %v736, %v1684
    %v1686 = vlaneseq
    %v1687 = vshrl.u32 %v1686, 7
    %v1688 = vsub.s32 3, %v1687
    %v1689 = vrot.slane %v736, %v1688
    %v1690 = vlaneseq
    %v1691 = vshrl.u32 %v1690, 7
    %v1692 = vsub.s32 4, %v1691
    %v1693 = vrot.slane %v736, %v1692
    %v1694 = vlaneseq
    %v1695 = vshrl.u32 %v1694, 7
    %v1696 = vsub.s32 5, %v1695
    %v1697 = vrot.slane %v736, %v1696
    %v1698 = vlaneseq
    %v1699 = vshrl.u32 %v1698, 7
    %v1700 = vsub.s32 6, %v1699
    %v1701 = vrot.slane %v736, %v1700
    %v1702 = vlaneseq
    %v1703 = vshrl.u32 %v1702, 7
    %v1704 = vsub.s32 7, %v1703
    %v1705 = vrot.slane %v736, %v1704
    %v1706 = vlaneseq
    %v1707 = vshrl.u32 %v1706, 7
    %v1708 = vsub.s32 0, %v1707
    %v1709 = vrot.slane %v739, %v1708
    %v1710 = vlaneseq
    %v1711 = vshrl.u32 %v1710, 7
    %v1712 = vsub.s32 1, %v1711
    %v1713 = vrot.slane %v739, %v1712
    %v1714 = vlaneseq
    %v1715 = vshrl.u32 %v1714, 7
    %v1716 = vsub.s32 2, %v1715
    %v1717 = vrot.slane %v739, %v1716
    %v1718 = vlaneseq
    %v1719 = vshrl.u32 %v1718, 7
    %v1720 = vsub.s32 3, %v1719
    %v1721 = vrot.slane %v739, %v1720
    %v1722 = vlaneseq
    %v1723 = vshrl.u32 %v1722, 7
    %v1724 = vsub.s32 4, %v1723
    %v1725 = vrot.slane %v739, %v1724
    %v1726 = vlaneseq
    %v1727 = vshrl.u32 %v1726, 7
    %v1728 = vsub.s32 5, %v1727
    %v1729 = vrot.slane %v739, %v1728
    %v1730 = vlaneseq
    %v1731 = vshrl.u32 %v1730, 7
    %v1732 = vsub.s32 6, %v1731
    %v1733 = vrot.slane %v739, %v1732
    %v1734 = vlaneseq
    %v1735 = vshrl.u32 %v1734, 7
    %v1736 = vsub.s32 7, %v1735
    %v1737 = vrot.slane %v739, %v1736
    %v1738 = vlaneseq
    %v1739 = vshrl.u32 %v1738, 7
    %v1740 = vsub.s32 0, %v1739
    %v1741 = vrot.slane %v742, %v1740
    %v1742 = vlaneseq
    %v1743 = vshrl.u32 %v1742, 7
    %v1744 = vsub.s32 1, %v1743
    %v1745 = vrot.slane %v742, %v1744
    %v1746 = vlaneseq
    %v1747 = vshrl.u32 %v1746, 7
    %v1748 = vsub.s32 2, %v1747
    %v1749 = vrot.slane %v742, %v1748
    %v1750 = vlaneseq
    %v1751 = vshrl.u32 %v1750, 7
    %v1752 = vsub.s32 3, %v1751
    %v1753 = vrot.slane %v742, %v1752
    %v1754 = vlaneseq
    %v1755 = vshrl.u32 %v1754, 7
    %v1756 = vsub.s32 4, %v1755
    %v1757 = vrot.slane %v742, %v1756
    %v1758 = vlaneseq
    %v1759 = vshrl.u32 %v1758, 7
    %v1760 = vsub.s32 5, %v1759
    %v1761 = vrot.slane %v742, %v1760
    %v1762 = vlaneseq
    %v1763 = vshrl.u32 %v1762, 7
    %v1764 = vsub.s32 6, %v1763
    %v1765 = vrot.slane %v742, %v1764
    %v1766 = vlaneseq
    %v1767 = vshrl.u32 %v1766, 7
    %v1768 = vsub.s32 7, %v1767
    %v1769 = vrot.slane %v742, %v1768
    %v1770 = vlaneseq
    %v1771 = vshrl.u32 %v1770, 7
    %v1772 = vsub.s32 0, %v1771
    %v1773 = vrot.slane %v745, %v1772
    %v1774 = vlaneseq
    %v1775 = vshrl.u32 %v1774, 7
    %v1776 = vsub.s32 1, %v1775
    %v1777 = vrot.slane %v745, %v1776
    %v1778 = vlaneseq
    %v1779 = vshrl.u32 %v1778, 7
    %v1780 = vsub.s32 2, %v1779
    %v1781 = vrot.slane %v745, %v1780
    %v1782 = vlaneseq
    %v1783 = vshrl.u32 %v1782, 7
    %v1784 = vsub.s32 3, %v1783
    %v1785 = vrot.slane %v745, %v1784
    %v1786 = vlaneseq
    %v1787 = vshrl.u32 %v1786, 7
    %v1788 = vsub.s32 4, %v1787
    %v1789 = vrot.slane %v745, %v1788
    %v1790 = vlaneseq
    %v1791 = vshrl.u32 %v1790, 7
    %v1792 = vsub.s32 5, %v1791
    %v1793 = vrot.slane %v745, %v1792
    %v1794 = vlaneseq
    %v1795 = vshrl.u32 %v1794, 7
    %v1796 = vsub.s32 6, %v1795
    %v1797 = vrot.slane %v745, %v1796
    %v1798 = vlaneseq
    %v1799 = vshrl.u32 %v1798, 7
    %v1800 = vsub.s32 7, %v1799
    %v1801 = vrot.slane %v745, %v1800
    %v1802 = vcombine.low %v781, %v785
    %v1803 = vcombine.low %v789, %v793
    %v1804 = vcombine.low %v797, %v801
    %v1805 = vcombine.low %v805, %v809
    %v1807 = vunpack.c.l.s4 1966171168
    %v1808 = vunpack.c.0.s8 %v1807
    %v1809 = vlaneseq
    %v1810 = vshrl.u32 %v1809, 7
    %v1811 = vsub.s32 %v1808, %v1810
    %v1812 = vrot.slane %v1802, %v1811
    %v1814 = vunpack.c.l.s4 1966171168
    %v1815 = vunpack.c.0.s8 %v1814
    %v1816 = vlaneseq
    %v1817 = vshrl.u32 %v1816, 7
    %v1818 = vsub.s32 %v1815, %v1817
    %v1819 = vrot.slane %v1803, %v1818
    %v1821 = vunpack.c.l.s4 1966171168
    %v1822 = vunpack.c.0.s8 %v1821
    %v1823 = vlaneseq
    %v1824 = vshrl.u32 %v1823, 7
    %v1825 = vsub.s32 %v1822, %v1824
    %v1826 = vrot.slane %v1804, %v1825
    %v1828 = vunpack.c.l.s4 1966171168
    %v1829 = vunpack.c.0.s8 %v1828
    %v1830 = vlaneseq
    %v1831 = vshrl.u32 %v1830, 7
    %v1832 = vsub.s32 %v1829, %v1831
    %v1833 = vrot.slane %v1805, %v1832
    %v1834 = vcombine.low %v1812, %v1819
    %v1835 = vcombine.low %v1826, %v1833
    %v1837 = vunpack.c.l.s4 1966171168
    %v1838 = vunpack.c.0.s8 %v1837
    %v1839 = vlaneseq
    %v1840 = vshrl.u32 %v1839, 7
    %v1841 = vsub.s32 %v1838, %v1840
    %v1842 = vrot.slane %v1834, %v1841
    %v1844 = vunpack.c.l.s4 1966171168
    %v1845 = vunpack.c.0.s8 %v1844
    %v1846 = vlaneseq
    %v1847 = vshrl.u32 %v1846, 7
    %v1848 = vsub.s32 %v1845, %v1847
    %v1849 = vrot.slane %v1835, %v1848
    %v1850 = vcombine.low %v1842, %v1849
    %v1851 = vcombine.low %v813, %v817
    %v1852 = vcombine.low %v821, %v825
    %v1853 = vcombine.low %v829, %v833
    %v1854 = vcombine.low %v837, %v841
    %v1856 = vunpack.c.l.s4 1966171168
    %v1857 = vunpack.c.0.s8 %v1856
    %v1858 = vlaneseq
    %v1859 = vshrl.u32 %v1858, 7
    %v1860 = vsub.s32 %v1857, %v1859
    %v1861 = vrot.slane %v1851, %v1860
    %v1863 = vunpack.c.l.s4 1966171168
    %v1864 = vunpack.c.0.s8 %v1863
    %v1865 = vlaneseq
    %v1866 = vshrl.u32 %v1865, 7
    %v1867 = vsub.s32 %v1864, %v1866
    %v1868 = vrot.slane %v1852, %v1867
    %v1870 = vunpack.c.l.s4 1966171168
    %v1871 = vunpack.c.0.s8 %v1870
    %v1872 = vlaneseq
    %v1873 = vshrl.u32 %v1872, 7
    %v1874 = vsub.s32 %v1871, %v1873
    %v1875 = vrot.slane %v1853, %v1874
    %v1877 = vunpack.c.l.s4 1966171168
    %v1878 = vunpack.c.0.s8 %v1877
    %v1879 = vlaneseq
    %v1880 = vshrl.u32 %v1879, 7
    %v1881 = vsub.s32 %v1878, %v1880
    %v1882 = vrot.slane %v1854, %v1881
    %v1883 = vcombine.low %v1861, %v1868
    %v1884 = vcombine.low %v1875, %v1882
    %v1886 = vunpack.c.l.s4 1966171168
    %v1887 = vunpack.c.0.s8 %v1886
    %v1888 = vlaneseq
    %v1889 = vshrl.u32 %v1888, 7
    %v1890 = vsub.s32 %v1887, %v1889
    %v1891 = vrot.slane %v1883, %v1890
    %v1893 = vunpack.c.l.s4 1966171168
    %v1894 = vunpack.c.0.s8 %v1893
    %v1895 = vlaneseq
    %v1896 = vshrl.u32 %v1895, 7
    %v1897 = vsub.s32 %v1894, %v1896
    %v1898 = vrot.slane %v1884, %v1897
    %v1899 = vcombine.low %v1891, %v1898
    %v1900 = vcombine.low %v845, %v849
    %v1901 = vcombine.low %v853, %v857
    %v1902 = vcombine.low %v861, %v865
    %v1903 = vcombine.low %v869, %v873
    %v1905 = vunpack.c.l.s4 1966171168
    %v1906 = vunpack.c.0.s8 %v1905
    %v1907 = vlaneseq
    %v1908 = vshrl.u32 %v1907, 7
    %v1909 = vsub.s32 %v1906, %v1908
    %v1910 = vrot.slane %v1900, %v1909
    %v1912 = vunpack.c.l.s4 1966171168
    %v1913 = vunpack.c.0.s8 %v1912
    %v1914 = vlaneseq
    %v1915 = vshrl.u32 %v1914, 7
    %v1916 = vsub.s32 %v1913, %v1915
    %v1917 = vrot.slane %v1901, %v1916
    %v1919 = vunpack.c.l.s4 1966171168
    %v1920 = vunpack.c.0.s8 %v1919
    %v1921 = vlaneseq
    %v1922 = vshrl.u32 %v1921, 7
    %v1923 = vsub.s32 %v1920, %v1922
    %v1924 = vrot.slane %v1902, %v1923
    %v1926 = vunpack.c.l.s4 1966171168
    %v1927 = vunpack.c.0.s8 %v1926
    %v1928 = vlaneseq
    %v1929 = vshrl.u32 %v1928, 7
    %v1930 = vsub.s32 %v1927, %v1929
    %v1931 = vrot.slane %v1903, %v1930
    %v1932 = vcombine.low %v1910, %v1917
    %v1933 = vcombine.low %v1924, %v1931
    %v1935 = vunpack.c.l.s4 1966171168
    %v1936 = vunpack.c.0.s8 %v1935
    %v1937 = vlaneseq
    %v1938 = vshrl.u32 %v1937, 7
    %v1939 = vsub.s32 %v1936, %v1938
    %v1940 = vrot.slane %v1932, %v1939
    %v1942 = vunpack.c.l.s4 1966171168
    %v1943 = vunpack.c.0.s8 %v1942
    %v1944 = vlaneseq
    %v1945 = vshrl.u32 %v1944, 7
    %v1946 = vsub.s32 %v1943, %v1945
    %v1947 = vrot.slane %v1933, %v1946
    %v1948 = vcombine.low %v1940, %v1947
    %v1949 = vcombine.low %v877, %v881
    %v1950 = vcombine.low %v885, %v889
    %v1951 = vcombine.low %v893, %v897
    %v1952 = vcombine.low %v901, %v905
    %v1954 = vunpack.c.l.s4 1966171168
    %v1955 = vunpack.c.0.s8 %v1954
    %v1956 = vlaneseq
    %v1957 = vshrl.u32 %v1956, 7
    %v1958 = vsub.s32 %v1955, %v1957
    %v1959 = vrot.slane %v1949, %v1958
    %v1961 = vunpack.c.l.s4 1966171168
    %v1962 = vunpack.c.0.s8 %v1961
    %v1963 = vlaneseq
    %v1964 = vshrl.u32 %v1963, 7
    %v1965 = vsub.s32 %v1962, %v1964
    %v1966 = vrot.slane %v1950, %v1965
    %v1968 = vunpack.c.l.s4 1966171168
    %v1969 = vunpack.c.0.s8 %v1968
    %v1970 = vlaneseq
    %v1971 = vshrl.u32 %v1970, 7
    %v1972 = vsub.s32 %v1969, %v1971
    %v1973 = vrot.slane %v1951, %v1972
    %v1975 = vunpack.c.l.s4 1966171168
    %v1976 = vunpack.c.0.s8 %v1975
    %v1977 = vlaneseq
    %v1978 = vshrl.u32 %v1977, 7
    %v1979 = vsub.s32 %v1976, %v1978
    %v1980 = vrot.slane %v1952, %v1979
    %v1981 = vcombine.low %v1959, %v1966
    %v1982 = vcombine.low %v1973, %v1980
    %v1984 = vunpack.c.l.s4 1966171168
    %v1985 = vunpack.c.0.s8 %v1984
    %v1986 = vlaneseq
    %v1987 = vshrl.u32 %v1986, 7
    %v1988 = vsub.s32 %v1985, %v1987
    %v1989 = vrot.slane %v1981, %v1988
    %v1991 = vunpack.c.l.s4 1966171168
    %v1992 = vunpack.c.0.s8 %v1991
    %v1993 = vlaneseq
    %v1994 = vshrl.u32 %v1993, 7
    %v1995 = vsub.s32 %v1992, %v1994
    %v1996 = vrot.slane %v1982, %v1995
    %v1997 = vcombine.low %v1989, %v1996
    %v1998 = vcombine.low %v909, %v913
    %v1999 = vcombine.low %v917, %v921
    %v2000 = vcombine.low %v925, %v929
    %v2001 = vcombine.low %v933, %v937
    %v2003 = vunpack.c.l.s4 1966171168
    %v2004 = vunpack.c.0.s8 %v2003
    %v2005 = vlaneseq
    %v2006 = vshrl.u32 %v2005, 7
    %v2007 = vsub.s32 %v2004, %v2006
    %v2008 = vrot.slane %v1998, %v2007
    %v2010 = vunpack.c.l.s4 1966171168
    %v2011 = vunpack.c.0.s8 %v2010
    %v2012 = vlaneseq
    %v2013 = vshrl.u32 %v2012, 7
    %v2014 = vsub.s32 %v2011, %v2013
    %v2015 = vrot.slane %v1999, %v2014
    %v2017 = vunpack.c.l.s4 1966171168
    %v2018 = vunpack.c.0.s8 %v2017
    %v2019 = vlaneseq
    %v2020 = vshrl.u32 %v2019, 7
    %v2021 = vsub.s32 %v2018, %v2020
    %v2022 = vrot.slane %v2000, %v2021
    %v2024 = vunpack.c.l.s4 1966171168
    %v2025 = vunpack.c.0.s8 %v2024
    %v2026 = vlaneseq
    %v2027 = vshrl.u32 %v2026, 7
    %v2028 = vsub.s32 %v2025, %v2027
    %v2029 = vrot.slane %v2001, %v2028
    %v2030 = vcombine.low %v2008, %v2015
    %v2031 = vcombine.low %v2022, %v2029
    %v2033 = vunpack.c.l.s4 1966171168
    %v2034 = vunpack.c.0.s8 %v2033
    %v2035 = vlaneseq
    %v2036 = vshrl.u32 %v2035, 7
    %v2037 = vsub.s32 %v2034, %v2036
    %v2038 = vrot.slane %v2030, %v2037
    %v2040 = vunpack.c.l.s4 1966171168
    %v2041 = vunpack.c.0.s8 %v2040
    %v2042 = vlaneseq
    %v2043 = vshrl.u32 %v2042, 7
    %v2044 = vsub.s32 %v2041, %v2043
    %v2045 = vrot.slane %v2031, %v2044
    %v2046 = vcombine.low %v2038, %v2045
    %v2047 = vcombine.low %v941, %v945
    %v2048 = vcombine.low %v949, %v953
    %v2049 = vcombine.low %v957, %v961
    %v2050 = vcombine.low %v965, %v969
    %v2052 = vunpack.c.l.s4 1966171168
    %v2053 = vunpack.c.0.s8 %v2052
    %v2054 = vlaneseq
    %v2055 = vshrl.u32 %v2054, 7
    %v2056 = vsub.s32 %v2053, %v2055
    %v2057 = vrot.slane %v2047, %v2056
    %v2059 = vunpack.c.l.s4 1966171168
    %v2060 = vunpack.c.0.s8 %v2059
    %v2061 = vlaneseq
    %v2062 = vshrl.u32 %v2061, 7
    %v2063 = vsub.s32 %v2060, %v2062
    %v2064 = vrot.slane %v2048, %v2063
    %v2066 = vunpack.c.l.s4 1966171168
    %v2067 = vunpack.c.0.s8 %v2066
    %v2068 = vlaneseq
    %v2069 = vshrl.u32 %v2068, 7
    %v2070 = vsub.s32 %v2067, %v2069
    %v2071 = vrot.slane %v2049, %v2070
    %v2073 = vunpack.c.l.s4 1966171168
    %v2074 = vunpack.c.0.s8 %v2073
    %v2075 = vlaneseq
    %v2076 = vshrl.u32 %v2075, 7
    %v2077 = vsub.s32 %v2074, %v2076
    %v2078 = vrot.slane %v2050, %v2077
    %v2079 = vcombine.low %v2057, %v2064
    %v2080 = vcombine.low %v2071, %v2078
    %v2082 = vunpack.c.l.s4 1966171168
    %v2083 = vunpack.c.0.s8 %v2082
    %v2084 = vlaneseq
    %v2085 = vshrl.u32 %v2084, 7
    %v2086 = vsub.s32 %v2083, %v2085
    %v2087 = vrot.slane %v2079, %v2086
    %v2089 = vunpack.c.l.s4 1966171168
    %v2090 = vunpack.c.0.s8 %v2089
    %v2091 = vlaneseq
    %v2092 = vshrl.u32 %v2091, 7
    %v2093 = vsub.s32 %v2090, %v2092
    %v2094 = vrot.slane %v2080, %v2093
    %v2095 = vcombine.low %v2087, %v2094
    %v2096 = vcombine.low %v973, %v977
    %v2097 = vcombine.low %v981, %v985
    %v2098 = vcombine.low %v989, %v993
    %v2099 = vcombine.low %v997, %v1001
    %v2101 = vunpack.c.l.s4 1966171168
    %v2102 = vunpack.c.0.s8 %v2101
    %v2103 = vlaneseq
    %v2104 = vshrl.u32 %v2103, 7
    %v2105 = vsub.s32 %v2102, %v2104
    %v2106 = vrot.slane %v2096, %v2105
    %v2108 = vunpack.c.l.s4 1966171168
    %v2109 = vunpack.c.0.s8 %v2108
    %v2110 = vlaneseq
    %v2111 = vshrl.u32 %v2110, 7
    %v2112 = vsub.s32 %v2109, %v2111
    %v2113 = vrot.slane %v2097, %v2112
    %v2115 = vunpack.c.l.s4 1966171168
    %v2116 = vunpack.c.0.s8 %v2115
    %v2117 = vlaneseq
    %v2118 = vshrl.u32 %v2117, 7
    %v2119 = vsub.s32 %v2116, %v2118
    %v2120 = vrot.slane %v2098, %v2119
    %v2122 = vunpack.c.l.s4 1966171168
    %v2123 = vunpack.c.0.s8 %v2122
    %v2124 = vlaneseq
    %v2125 = vshrl.u32 %v2124, 7
    %v2126 = vsub.s32 %v2123, %v2125
    %v2127 = vrot.slane %v2099, %v2126
    %v2128 = vcombine.low %v2106, %v2113
    %v2129 = vcombine.low %v2120, %v2127
    %v2131 = vunpack.c.l.s4 1966171168
    %v2132 = vunpack.c.0.s8 %v2131
    %v2133 = vlaneseq
    %v2134 = vshrl.u32 %v2133, 7
    %v2135 = vsub.s32 %v2132, %v2134
    %v2136 = vrot.slane %v2128, %v2135
    %v2138 = vunpack.c.l.s4 1966171168
    %v2139 = vunpack.c.0.s8 %v2138
    %v2140 = vlaneseq
    %v2141 = vshrl.u32 %v2140, 7
    %v2142 = vsub.s32 %v2139, %v2141
    %v2143 = vrot.slane %v2129, %v2142
    %v2144 = vcombine.low %v2136, %v2143
    %v2145 = vcombine.low %v1005, %v1009
    %v2146 = vcombine.low %v1013, %v1017
    %v2147 = vcombine.low %v1021, %v1025
    %v2148 = vcombine.low %v1029, %v1033
    %v2150 = vunpack.c.l.s4 1966171168
    %v2151 = vunpack.c.0.s8 %v2150
    %v2152 = vlaneseq
    %v2153 = vshrl.u32 %v2152, 7
    %v2154 = vsub.s32 %v2151, %v2153
    %v2155 = vrot.slane %v2145, %v2154
    %v2157 = vunpack.c.l.s4 1966171168
    %v2158 = vunpack.c.0.s8 %v2157
    %v2159 = vlaneseq
    %v2160 = vshrl.u32 %v2159, 7
    %v2161 = vsub.s32 %v2158, %v2160
    %v2162 = vrot.slane %v2146, %v2161
    %v2164 = vunpack.c.l.s4 1966171168
    %v2165 = vunpack.c.0.s8 %v2164
    %v2166 = vlaneseq
    %v2167 = vshrl.u32 %v2166, 7
    %v2168 = vsub.s32 %v2165, %v2167
    %v2169 = vrot.slane %v2147, %v2168
    %v2171 = vunpack.c.l.s4 1966171168
    %v2172 = vunpack.c.0.s8 %v2171
    %v2173 = vlaneseq
    %v2174 = vshrl.u32 %v2173, 7
    %v2175 = vsub.s32 %v2172, %v2174
    %v2176 = vrot.slane %v2148, %v2175
    %v2177 = vcombine.low %v2155, %v2162
    %v2178 = vcombine.low %v2169, %v2176
    %v2180 = vunpack.c.l.s4 1966171168
    %v2181 = vunpack.c.0.s8 %v2180
    %v2182 = vlaneseq
    %v2183 = vshrl.u32 %v2182, 7
    %v2184 = vsub.s32 %v2181, %v2183
    %v2185 = vrot.slane %v2177, %v2184
    %v2187 = vunpack.c.l.s4 1966171168
    %v2188 = vunpack.c.0.s8 %v2187
    %v2189 = vlaneseq
    %v2190 = vshrl.u32 %v2189, 7
    %v2191 = vsub.s32 %v2188, %v2190
    %v2192 = vrot.slane %v2178, %v2191
    %v2193 = vcombine.low %v2185, %v2192
    %v2194 = vcombine.low %v1037, %v1041
    %v2195 = vcombine.low %v1045, %v1049
    %v2196 = vcombine.low %v1053, %v1057
    %v2197 = vcombine.low %v1061, %v1065
    %v2199 = vunpack.c.l.s4 1966171168
    %v2200 = vunpack.c.0.s8 %v2199
    %v2201 = vlaneseq
    %v2202 = vshrl.u32 %v2201, 7
    %v2203 = vsub.s32 %v2200, %v2202
    %v2204 = vrot.slane %v2194, %v2203
    %v2206 = vunpack.c.l.s4 1966171168
    %v2207 = vunpack.c.0.s8 %v2206
    %v2208 = vlaneseq
    %v2209 = vshrl.u32 %v2208, 7
    %v2210 = vsub.s32 %v2207, %v2209
    %v2211 = vrot.slane %v2195, %v2210
    %v2213 = vunpack.c.l.s4 1966171168
    %v2214 = vunpack.c.0.s8 %v2213
    %v2215 = vlaneseq
    %v2216 = vshrl.u32 %v2215, 7
    %v2217 = vsub.s32 %v2214, %v2216
    %v2218 = vrot.slane %v2196, %v2217
    %v2220 = vunpack.c.l.s4 1966171168
    %v2221 = vunpack.c.0.s8 %v2220
    %v2222 = vlaneseq
    %v2223 = vshrl.u32 %v2222, 7
    %v2224 = vsub.s32 %v2221, %v2223
    %v2225 = vrot.slane %v2197, %v2224
    %v2226 = vcombine.low %v2204, %v2211
    %v2227 = vcombine.low %v2218, %v2225
    %v2229 = vunpack.c.l.s4 1966171168
    %v2230 = vunpack.c.0.s8 %v2229
    %v2231 = vlaneseq
    %v2232 = vshrl.u32 %v2231, 7
    %v2233 = vsub.s32 %v2230, %v2232
    %v2234 = vrot.slane %v2226, %v2233
    %v2236 = vunpack.c.l.s4 1966171168
    %v2237 = vunpack.c.0.s8 %v2236
    %v2238 = vlaneseq
    %v2239 = vshrl.u32 %v2238, 7
    %v2240 = vsub.s32 %v2237, %v2239
    %v2241 = vrot.slane %v2227, %v2240
    %v2242 = vcombine.low %v2234, %v2241
    %v2243 = vcombine.low %v1069, %v1073
    %v2244 = vcombine.low %v1077, %v1081
    %v2245 = vcombine.low %v1085, %v1089
    %v2246 = vcombine.low %v1093, %v1097
    %v2248 = vunpack.c.l.s4 1966171168
    %v2249 = vunpack.c.0.s8 %v2248
    %v2250 = vlaneseq
    %v2251 = vshrl.u32 %v2250, 7
    %v2252 = vsub.s32 %v2249, %v2251
    %v2253 = vrot.slane %v2243, %v2252
    %v2255 = vunpack.c.l.s4 1966171168
    %v2256 = vunpack.c.0.s8 %v2255
    %v2257 = vlaneseq
    %v2258 = vshrl.u32 %v2257, 7
    %v2259 = vsub.s32 %v2256, %v2258
    %v2260 = vrot.slane %v2244, %v2259
    %v2262 = vunpack.c.l.s4 1966171168
    %v2263 = vunpack.c.0.s8 %v2262
    %v2264 = vlaneseq
    %v2265 = vshrl.u32 %v2264, 7
    %v2266 = vsub.s32 %v2263, %v2265
    %v2267 = vrot.slane %v2245, %v2266
    %v2269 = vunpack.c.l.s4 1966171168
    %v2270 = vunpack.c.0.s8 %v2269
    %v2271 = vlaneseq
    %v2272 = vshrl.u32 %v2271, 7
    %v2273 = vsub.s32 %v2270, %v2272
    %v2274 = vrot.slane %v2246, %v2273
    %v2275 = vcombine.low %v2253, %v2260
    %v2276 = vcombine.low %v2267, %v2274
    %v2278 = vunpack.c.l.s4 1966171168
    %v2279 = vunpack.c.0.s8 %v2278
    %v2280 = vlaneseq
    %v2281 = vshrl.u32 %v2280, 7
    %v2282 = vsub.s32 %v2279, %v2281
    %v2283 = vrot.slane %v2275, %v2282
    %v2285 = vunpack.c.l.s4 1966171168
    %v2286 = vunpack.c.0.s8 %v2285
    %v2287 = vlaneseq
    %v2288 = vshrl.u32 %v2287, 7
    %v2289 = vsub.s32 %v2286, %v2288
    %v2290 = vrot.slane %v2276, %v2289
    %v2291 = vcombine.low %v2283, %v2290
    %v2292 = vcombine.low %v1101, %v1105
    %v2293 = vcombine.low %v1109, %v1113
    %v2294 = vcombine.low %v1117, %v1121
    %v2295 = vcombine.low %v1125, %v1129
    %v2297 = vunpack.c.l.s4 1966171168
    %v2298 = vunpack.c.0.s8 %v2297
    %v2299 = vlaneseq
    %v2300 = vshrl.u32 %v2299, 7
    %v2301 = vsub.s32 %v2298, %v2300
    %v2302 = vrot.slane %v2292, %v2301
    %v2304 = vunpack.c.l.s4 1966171168
    %v2305 = vunpack.c.0.s8 %v2304
    %v2306 = vlaneseq
    %v2307 = vshrl.u32 %v2306, 7
    %v2308 = vsub.s32 %v2305, %v2307
    %v2309 = vrot.slane %v2293, %v2308
    %v2311 = vunpack.c.l.s4 1966171168
    %v2312 = vunpack.c.0.s8 %v2311
    %v2313 = vlaneseq
    %v2314 = vshrl.u32 %v2313, 7
    %v2315 = vsub.s32 %v2312, %v2314
    %v2316 = vrot.slane %v2294, %v2315
    %v2318 = vunpack.c.l.s4 1966171168
    %v2319 = vunpack.c.0.s8 %v2318
    %v2320 = vlaneseq
    %v2321 = vshrl.u32 %v2320, 7
    %v2322 = vsub.s32 %v2319, %v2321
    %v2323 = vrot.slane %v2295, %v2322
    %v2324 = vcombine.low %v2302, %v2309
    %v2325 = vcombine.low %v2316, %v2323
    %v2327 = vunpack.c.l.s4 1966171168
    %v2328 = vunpack.c.0.s8 %v2327
    %v2329 = vlaneseq
    %v2330 = vshrl.u32 %v2329, 7
    %v2331 = vsub.s32 %v2328, %v2330
    %v2332 = vrot.slane %v2324, %v2331
    %v2334 = vunpack.c.l.s4 1966171168
    %v2335 = vunpack.c.0.s8 %v2334
    %v2336 = vlaneseq
    %v2337 = vshrl.u32 %v2336, 7
    %v2338 = vsub.s32 %v2335, %v2337
    %v2339 = vrot.slane %v2325, %v2338
    %v2340 = vcombine.low %v2332, %v2339
    %v2341 = vcombine.low %v1133, %v1137
    %v2342 = vcombine.low %v1141, %v1145
    %v2343 = vcombine.low %v1149, %v1153
    %v2344 = vcombine.low %v1157, %v1161
    %v2346 = vunpack.c.l.s4 1966171168
    %v2347 = vunpack.c.0.s8 %v2346
    %v2348 = vlaneseq
    %v2349 = vshrl.u32 %v2348, 7
    %v2350 = vsub.s32 %v2347, %v2349
    %v2351 = vrot.slane %v2341, %v2350
    %v2353 = vunpack.c.l.s4 1966171168
    %v2354 = vunpack.c.0.s8 %v2353
    %v2355 = vlaneseq
    %v2356 = vshrl.u32 %v2355, 7
    %v2357 = vsub.s32 %v2354, %v2356
    %v2358 = vrot.slane %v2342, %v2357
    %v2360 = vunpack.c.l.s4 1966171168
    %v2361 = vunpack.c.0.s8 %v2360
    %v2362 = vlaneseq
    %v2363 = vshrl.u32 %v2362, 7
    %v2364 = vsub.s32 %v2361, %v2363
    %v2365 = vrot.slane %v2343, %v2364
    %v2367 = vunpack.c.l.s4 1966171168
    %v2368 = vunpack.c.0.s8 %v2367
    %v2369 = vlaneseq
    %v2370 = vshrl.u32 %v2369, 7
    %v2371 = vsub.s32 %v2368, %v2370
    %v2372 = vrot.slane %v2344, %v2371
    %v2373 = vcombine.low %v2351, %v2358
    %v2374 = vcombine.low %v2365, %v2372
    %v2376 = vunpack.c.l.s4 1966171168
    %v2377 = vunpack.c.0.s8 %v2376
    %v2378 = vlaneseq
    %v2379 = vshrl.u32 %v2378, 7
    %v2380 = vsub.s32 %v2377, %v2379
    %v2381 = vrot.slane %v2373, %v2380
    %v2383 = vunpack.c.l.s4 1966171168
    %v2384 = vunpack.c.0.s8 %v2383
    %v2385 = vlaneseq
    %v2386 = vshrl.u32 %v2385, 7
    %v2387 = vsub.s32 %v2384, %v2386
    %v2388 = vrot.slane %v2374, %v2387
    %v2389 = vcombine.low %v2381, %v2388
    %v2390 = vcombine.low %v1165, %v1169
    %v2391 = vcombine.low %v1173, %v1177
    %v2392 = vcombine.low %v1181, %v1185
    %v2393 = vcombine.low %v1189, %v1193
    %v2395 = vunpack.c.l.s4 1966171168
    %v2396 = vunpack.c.0.s8 %v2395
    %v2397 = vlaneseq
    %v2398 = vshrl.u32 %v2397, 7
    %v2399 = vsub.s32 %v2396, %v2398
    %v2400 = vrot.slane %v2390, %v2399
    %v2402 = vunpack.c.l.s4 1966171168
    %v2403 = vunpack.c.0.s8 %v2402
    %v2404 = vlaneseq
    %v2405 = vshrl.u32 %v2404, 7
    %v2406 = vsub.s32 %v2403, %v2405
    %v2407 = vrot.slane %v2391, %v2406
    %v2409 = vunpack.c.l.s4 1966171168
    %v2410 = vunpack.c.0.s8 %v2409
    %v2411 = vlaneseq
    %v2412 = vshrl.u32 %v2411, 7
    %v2413 = vsub.s32 %v2410, %v2412
    %v2414 = vrot.slane %v2392, %v2413
    %v2416 = vunpack.c.l.s4 1966171168
    %v2417 = vunpack.c.0.s8 %v2416
    %v2418 = vlaneseq
    %v2419 = vshrl.u32 %v2418, 7
    %v2420 = vsub.s32 %v2417, %v2419
    %v2421 = vrot.slane %v2393, %v2420
    %v2422 = vcombine.low %v2400, %v2407
    %v2423 = vcombine.low %v2414, %v2421
    %v2425 = vunpack.c.l.s4 1966171168
    %v2426 = vunpack.c.0.s8 %v2425
    %v2427 = vlaneseq
    %v2428 = vshrl.u32 %v2427, 7
    %v2429 = vsub.s32 %v2426, %v2428
    %v2430 = vrot.slane %v2422, %v2429
    %v2432 = vunpack.c.l.s4 1966171168
    %v2433 = vunpack.c.0.s8 %v2432
    %v2434 = vlaneseq
    %v2435 = vshrl.u32 %v2434, 7
    %v2436 = vsub.s32 %v2433, %v2435
    %v2437 = vrot.slane %v2423, %v2436
    %v2438 = vcombine.low %v2430, %v2437
    %v2439 = vcombine.low %v1197, %v1201
    %v2440 = vcombine.low %v1205, %v1209
    %v2441 = vcombine.low %v1213, %v1217
    %v2442 = vcombine.low %v1221, %v1225
    %v2444 = vunpack.c.l.s4 1966171168
    %v2445 = vunpack.c.0.s8 %v2444
    %v2446 = vlaneseq
    %v2447 = vshrl.u32 %v2446, 7
    %v2448 = vsub.s32 %v2445, %v2447
    %v2449 = vrot.slane %v2439, %v2448
    %v2451 = vunpack.c.l.s4 1966171168
    %v2452 = vunpack.c.0.s8 %v2451
    %v2453 = vlaneseq
    %v2454 = vshrl.u32 %v2453, 7
    %v2455 = vsub.s32 %v2452, %v2454
    %v2456 = vrot.slane %v2440, %v2455
    %v2458 = vunpack.c.l.s4 1966171168
    %v2459 = vunpack.c.0.s8 %v2458
    %v2460 = vlaneseq
    %v2461 = vshrl.u32 %v2460, 7
    %v2462 = vsub.s32 %v2459, %v2461
    %v2463 = vrot.slane %v2441, %v2462
    %v2465 = vunpack.c.l.s4 1966171168
    %v2466 = vunpack.c.0.s8 %v2465
    %v2467 = vlaneseq
    %v2468 = vshrl.u32 %v2467, 7
    %v2469 = vsub.s32 %v2466, %v2468
    %v2470 = vrot.slane %v2442, %v2469
    %v2471 = vcombine.low %v2449, %v2456
    %v2472 = vcombine.low %v2463, %v2470
    %v2474 = vunpack.c.l.s4 1966171168
    %v2475 = vunpack.c.0.s8 %v2474
    %v2476 = vlaneseq
    %v2477 = vshrl.u32 %v2476, 7
    %v2478 = vsub.s32 %v2475, %v2477
    %v2479 = vrot.slane %v2471, %v2478
    %v2481 = vunpack.c.l.s4 1966171168
    %v2482 = vunpack.c.0.s8 %v2481
    %v2483 = vlaneseq
    %v2484 = vshrl.u32 %v2483, 7
    %v2485 = vsub.s32 %v2482, %v2484
    %v2486 = vrot.slane %v2472, %v2485
    %v2487 = vcombine.low %v2479, %v2486
    %v2488 = vcombine.low %v1229, %v1233
    %v2489 = vcombine.low %v1237, %v1241
    %v2490 = vcombine.low %v1245, %v1249
    %v2491 = vcombine.low %v1253, %v1257
    %v2493 = vunpack.c.l.s4 1966171168
    %v2494 = vunpack.c.0.s8 %v2493
    %v2495 = vlaneseq
    %v2496 = vshrl.u32 %v2495, 7
    %v2497 = vsub.s32 %v2494, %v2496
    %v2498 = vrot.slane %v2488, %v2497
    %v2500 = vunpack.c.l.s4 1966171168
    %v2501 = vunpack.c.0.s8 %v2500
    %v2502 = vlaneseq
    %v2503 = vshrl.u32 %v2502, 7
    %v2504 = vsub.s32 %v2501, %v2503
    %v2505 = vrot.slane %v2489, %v2504
    %v2507 = vunpack.c.l.s4 1966171168
    %v2508 = vunpack.c.0.s8 %v2507
    %v2509 = vlaneseq
    %v2510 = vshrl.u32 %v2509, 7
    %v2511 = vsub.s32 %v2508, %v2510
    %v2512 = vrot.slane %v2490, %v2511
    %v2514 = vunpack.c.l.s4 1966171168
    %v2515 = vunpack.c.0.s8 %v2514
    %v2516 = vlaneseq
    %v2517 = vshrl.u32 %v2516, 7
    %v2518 = vsub.s32 %v2515, %v2517
    %v2519 = vrot.slane %v2491, %v2518
    %v2520 = vcombine.low %v2498, %v2505
    %v2521 = vcombine.low %v2512, %v2519
    %v2523 = vunpack.c.l.s4 1966171168
    %v2524 = vunpack.c.0.s8 %v2523
    %v2525 = vlaneseq
    %v2526 = vshrl.u32 %v2525, 7
    %v2527 = vsub.s32 %v2524, %v2526
    %v2528 = vrot.slane %v2520, %v2527
    %v2530 = vunpack.c.l.s4 1966171168
    %v2531 = vunpack.c.0.s8 %v2530
    %v2532 = vlaneseq
    %v2533 = vshrl.u32 %v2532, 7
    %v2534 = vsub.s32 %v2531, %v2533
    %v2535 = vrot.slane %v2521, %v2534
    %v2536 = vcombine.low %v2528, %v2535
    %v2537 = vcombine.low %v1261, %v1265
    %v2538 = vcombine.low %v1269, %v1273
    %v2539 = vcombine.low %v1277, %v1281
    %v2540 = vcombine.low %v1285, %v1289
    %v2542 = vunpack.c.l.s4 1966171168
    %v2543 = vunpack.c.0.s8 %v2542
    %v2544 = vlaneseq
    %v2545 = vshrl.u32 %v2544, 7
    %v2546 = vsub.s32 %v2543, %v2545
    %v2547 = vrot.slane %v2537, %v2546
    %v2549 = vunpack.c.l.s4 1966171168
    %v2550 = vunpack.c.0.s8 %v2549
    %v2551 = vlaneseq
    %v2552 = vshrl.u32 %v2551, 7
    %v2553 = vsub.s32 %v2550, %v2552
    %v2554 = vrot.slane %v2538, %v2553
    %v2556 = vunpack.c.l.s4 1966171168
    %v2557 = vunpack.c.0.s8 %v2556
    %v2558 = vlaneseq
    %v2559 = vshrl.u32 %v2558, 7
    %v2560 = vsub.s32 %v2557, %v2559
    %v2561 = vrot.slane %v2539, %v2560
    %v2563 = vunpack.c.l.s4 1966171168
    %v2564 = vunpack.c.0.s8 %v2563
    %v2565 = vlaneseq
    %v2566 = vshrl.u32 %v2565, 7
    %v2567 = vsub.s32 %v2564, %v2566
    %v2568 = vrot.slane %v2540, %v2567
    %v2569 = vcombine.low %v2547, %v2554
    %v2570 = vcombine.low %v2561, %v2568
    %v2572 = vunpack.c.l.s4 1966171168
    %v2573 = vunpack.c.0.s8 %v2572
    %v2574 = vlaneseq
    %v2575 = vshrl.u32 %v2574, 7
    %v2576 = vsub.s32 %v2573, %v2575
    %v2577 = vrot.slane %v2569, %v2576
    %v2579 = vunpack.c.l.s4 1966171168
    %v2580 = vunpack.c.0.s8 %v2579
    %v2581 = vlaneseq
    %v2582 = vshrl.u32 %v2581, 7
    %v2583 = vsub.s32 %v2580, %v2582
    %v2584 = vrot.slane %v2570, %v2583
    %v2585 = vcombine.low %v2577, %v2584
    %v2586 = vcombine.low %v1293, %v1297
    %v2587 = vcombine.low %v1301, %v1305
    %v2588 = vcombine.low %v1309, %v1313
    %v2589 = vcombine.low %v1317, %v1321
    %v2591 = vunpack.c.l.s4 1966171168
    %v2592 = vunpack.c.0.s8 %v2591
    %v2593 = vlaneseq
    %v2594 = vshrl.u32 %v2593, 7
    %v2595 = vsub.s32 %v2592, %v2594
    %v2596 = vrot.slane %v2586, %v2595
    %v2598 = vunpack.c.l.s4 1966171168
    %v2599 = vunpack.c.0.s8 %v2598
    %v2600 = vlaneseq
    %v2601 = vshrl.u32 %v2600, 7
    %v2602 = vsub.s32 %v2599, %v2601
    %v2603 = vrot.slane %v2587, %v2602
    %v2605 = vunpack.c.l.s4 1966171168
    %v2606 = vunpack.c.0.s8 %v2605
    %v2607 = vlaneseq
    %v2608 = vshrl.u32 %v2607, 7
    %v2609 = vsub.s32 %v2606, %v2608
    %v2610 = vrot.slane %v2588, %v2609
    %v2612 = vunpack.c.l.s4 1966171168
    %v2613 = vunpack.c.0.s8 %v2612
    %v2614 = vlaneseq
    %v2615 = vshrl.u32 %v2614, 7
    %v2616 = vsub.s32 %v2613, %v2615
    %v2617 = vrot.slane %v2589, %v2616
    %v2618 = vcombine.low %v2596, %v2603
    %v2619 = vcombine.low %v2610, %v2617
    %v2621 = vunpack.c.l.s4 1966171168
    %v2622 = vunpack.c.0.s8 %v2621
    %v2623 = vlaneseq
    %v2624 = vshrl.u32 %v2623, 7
    %v2625 = vsub.s32 %v2622, %v2624
    %v2626 = vrot.slane %v2618, %v2625
    %v2628 = vunpack.c.l.s4 1966171168
    %v2629 = vunpack.c.0.s8 %v2628
    %v2630 = vlaneseq
    %v2631 = vshrl.u32 %v2630, 7
    %v2632 = vsub.s32 %v2629, %v2631
    %v2633 = vrot.slane %v2619, %v2632
    %v2634 = vcombine.low %v2626, %v2633
    %v2635 = vcombine.low %v1325, %v1329
    %v2636 = vcombine.low %v1333, %v1337
    %v2637 = vcombine.low %v1341, %v1345
    %v2638 = vcombine.low %v1349, %v1353
    %v2640 = vunpack.c.l.s4 1966171168
    %v2641 = vunpack.c.0.s8 %v2640
    %v2642 = vlaneseq
    %v2643 = vshrl.u32 %v2642, 7
    %v2644 = vsub.s32 %v2641, %v2643
    %v2645 = vrot.slane %v2635, %v2644
    %v2647 = vunpack.c.l.s4 1966171168
    %v2648 = vunpack.c.0.s8 %v2647
    %v2649 = vlaneseq
    %v2650 = vshrl.u32 %v2649, 7
    %v2651 = vsub.s32 %v2648, %v2650
    %v2652 = vrot.slane %v2636, %v2651
    %v2654 = vunpack.c.l.s4 1966171168
    %v2655 = vunpack.c.0.s8 %v2654
    %v2656 = vlaneseq
    %v2657 = vshrl.u32 %v2656, 7
    %v2658 = vsub.s32 %v2655, %v2657
    %v2659 = vrot.slane %v2637, %v2658
    %v2661 = vunpack.c.l.s4 1966171168
    %v2662 = vunpack.c.0.s8 %v2661
    %v2663 = vlaneseq
    %v2664 = vshrl.u32 %v2663, 7
    %v2665 = vsub.s32 %v2662, %v2664
    %v2666 = vrot.slane %v2638, %v2665
    %v2667 = vcombine.low %v2645, %v2652
    %v2668 = vcombine.low %v2659, %v2666
    %v2670 = vunpack.c.l.s4 1966171168
    %v2671 = vunpack.c.0.s8 %v2670
    %v2672 = vlaneseq
    %v2673 = vshrl.u32 %v2672, 7
    %v2674 = vsub.s32 %v2671, %v2673
    %v2675 = vrot.slane %v2667, %v2674
    %v2677 = vunpack.c.l.s4 1966171168
    %v2678 = vunpack.c.0.s8 %v2677
    %v2679 = vlaneseq
    %v2680 = vshrl.u32 %v2679, 7
    %v2681 = vsub.s32 %v2678, %v2680
    %v2682 = vrot.slane %v2668, %v2681
    %v2683 = vcombine.low %v2675, %v2682
    %v2684 = vcombine.low %v1357, %v1361
    %v2685 = vcombine.low %v1365, %v1369
    %v2686 = vcombine.low %v1373, %v1377
    %v2687 = vcombine.low %v1381, %v1385
    %v2689 = vunpack.c.l.s4 1966171168
    %v2690 = vunpack.c.0.s8 %v2689
    %v2691 = vlaneseq
    %v2692 = vshrl.u32 %v2691, 7
    %v2693 = vsub.s32 %v2690, %v2692
    %v2694 = vrot.slane %v2684, %v2693
    %v2696 = vunpack.c.l.s4 1966171168
    %v2697 = vunpack.c.0.s8 %v2696
    %v2698 = vlaneseq
    %v2699 = vshrl.u32 %v2698, 7
    %v2700 = vsub.s32 %v2697, %v2699
    %v2701 = vrot.slane %v2685, %v2700
    %v2703 = vunpack.c.l.s4 1966171168
    %v2704 = vunpack.c.0.s8 %v2703
    %v2705 = vlaneseq
    %v2706 = vshrl.u32 %v2705, 7
    %v2707 = vsub.s32 %v2704, %v2706
    %v2708 = vrot.slane %v2686, %v2707
    %v2710 = vunpack.c.l.s4 1966171168
    %v2711 = vunpack.c.0.s8 %v2710
    %v2712 = vlaneseq
    %v2713 = vshrl.u32 %v2712, 7
    %v2714 = vsub.s32 %v2711, %v2713
    %v2715 = vrot.slane %v2687, %v2714
    %v2716 = vcombine.low %v2694, %v2701
    %v2717 = vcombine.low %v2708, %v2715
    %v2719 = vunpack.c.l.s4 1966171168
    %v2720 = vunpack.c.0.s8 %v2719
    %v2721 = vlaneseq
    %v2722 = vshrl.u32 %v2721, 7
    %v2723 = vsub.s32 %v2720, %v2722
    %v2724 = vrot.slane %v2716, %v2723
    %v2726 = vunpack.c.l.s4 1966171168
    %v2727 = vunpack.c.0.s8 %v2726
    %v2728 = vlaneseq
    %v2729 = vshrl.u32 %v2728, 7
    %v2730 = vsub.s32 %v2727, %v2729
    %v2731 = vrot.slane %v2717, %v2730
    %v2732 = vcombine.low %v2724, %v2731
    %v2733 = vcombine.low %v1389, %v1393
    %v2734 = vcombine.low %v1397, %v1401
    %v2735 = vcombine.low %v1405, %v1409
    %v2736 = vcombine.low %v1413, %v1417
    %v2738 = vunpack.c.l.s4 1966171168
    %v2739 = vunpack.c.0.s8 %v2738
    %v2740 = vlaneseq
    %v2741 = vshrl.u32 %v2740, 7
    %v2742 = vsub.s32 %v2739, %v2741
    %v2743 = vrot.slane %v2733, %v2742
    %v2745 = vunpack.c.l.s4 1966171168
    %v2746 = vunpack.c.0.s8 %v2745
    %v2747 = vlaneseq
    %v2748 = vshrl.u32 %v2747, 7
    %v2749 = vsub.s32 %v2746, %v2748
    %v2750 = vrot.slane %v2734, %v2749
    %v2752 = vunpack.c.l.s4 1966171168
    %v2753 = vunpack.c.0.s8 %v2752
    %v2754 = vlaneseq
    %v2755 = vshrl.u32 %v2754, 7
    %v2756 = vsub.s32 %v2753, %v2755
    %v2757 = vrot.slane %v2735, %v2756
    %v2759 = vunpack.c.l.s4 1966171168
    %v2760 = vunpack.c.0.s8 %v2759
    %v2761 = vlaneseq
    %v2762 = vshrl.u32 %v2761, 7
    %v2763 = vsub.s32 %v2760, %v2762
    %v2764 = vrot.slane %v2736, %v2763
    %v2765 = vcombine.low %v2743, %v2750
    %v2766 = vcombine.low %v2757, %v2764
    %v2768 = vunpack.c.l.s4 1966171168
    %v2769 = vunpack.c.0.s8 %v2768
    %v2770 = vlaneseq
    %v2771 = vshrl.u32 %v2770, 7
    %v2772 = vsub.s32 %v2769, %v2771
    %v2773 = vrot.slane %v2765, %v2772
    %v2775 = vunpack.c.l.s4 1966171168
    %v2776 = vunpack.c.0.s8 %v2775
    %v2777 = vlaneseq
    %v2778 = vshrl.u32 %v2777, 7
    %v2779 = vsub.s32 %v2776, %v2778
    %v2780 = vrot.slane %v2766, %v2779
    %v2781 = vcombine.low %v2773, %v2780
    %v2782 = vcombine.low %v1421, %v1425
    %v2783 = vcombine.low %v1429, %v1433
    %v2784 = vcombine.low %v1437, %v1441
    %v2785 = vcombine.low %v1445, %v1449
    %v2787 = vunpack.c.l.s4 1966171168
    %v2788 = vunpack.c.0.s8 %v2787
    %v2789 = vlaneseq
    %v2790 = vshrl.u32 %v2789, 7
    %v2791 = vsub.s32 %v2788, %v2790
    %v2792 = vrot.slane %v2782, %v2791
    %v2794 = vunpack.c.l.s4 1966171168
    %v2795 = vunpack.c.0.s8 %v2794
    %v2796 = vlaneseq
    %v2797 = vshrl.u32 %v2796, 7
    %v2798 = vsub.s32 %v2795, %v2797
    %v2799 = vrot.slane %v2783, %v2798
    %v2801 = vunpack.c.l.s4 1966171168
    %v2802 = vunpack.c.0.s8 %v2801
    %v2803 = vlaneseq
    %v2804 = vshrl.u32 %v2803, 7
    %v2805 = vsub.s32 %v2802, %v2804
    %v2806 = vrot.slane %v2784, %v2805
    %v2808 = vunpack.c.l.s4 1966171168
    %v2809 = vunpack.c.0.s8 %v2808
    %v2810 = vlaneseq
    %v2811 = vshrl.u32 %v2810, 7
    %v2812 = vsub.s32 %v2809, %v2811
    %v2813 = vrot.slane %v2785, %v2812
    %v2814 = vcombine.low %v2792, %v2799
    %v2815 = vcombine.low %v2806, %v2813
    %v2817 = vunpack.c.l.s4 1966171168
    %v2818 = vunpack.c.0.s8 %v2817
    %v2819 = vlaneseq
    %v2820 = vshrl.u32 %v2819, 7
    %v2821 = vsub.s32 %v2818, %v2820
    %v2822 = vrot.slane %v2814, %v2821
    %v2824 = vunpack.c.l.s4 1966171168
    %v2825 = vunpack.c.0.s8 %v2824
    %v2826 = vlaneseq
    %v2827 = vshrl.u32 %v2826, 7
    %v2828 = vsub.s32 %v2825, %v2827
    %v2829 = vrot.slane %v2815, %v2828
    %v2830 = vcombine.low %v2822, %v2829
    %v2831 = vcombine.low %v1453, %v1457
    %v2832 = vcombine.low %v1461, %v1465
    %v2833 = vcombine.low %v1469, %v1473
    %v2834 = vcombine.low %v1477, %v1481
    %v2836 = vunpack.c.l.s4 1966171168
    %v2837 = vunpack.c.0.s8 %v2836
    %v2838 = vlaneseq
    %v2839 = vshrl.u32 %v2838, 7
    %v2840 = vsub.s32 %v2837, %v2839
    %v2841 = vrot.slane %v2831, %v2840
    %v2843 = vunpack.c.l.s4 1966171168
    %v2844 = vunpack.c.0.s8 %v2843
    %v2845 = vlaneseq
    %v2846 = vshrl.u32 %v2845, 7
    %v2847 = vsub.s32 %v2844, %v2846
    %v2848 = vrot.slane %v2832, %v2847
    %v2850 = vunpack.c.l.s4 1966171168
    %v2851 = vunpack.c.0.s8 %v2850
    %v2852 = vlaneseq
    %v2853 = vshrl.u32 %v2852, 7
    %v2854 = vsub.s32 %v2851, %v2853
    %v2855 = vrot.slane %v2833, %v2854
    %v2857 = vunpack.c.l.s4 1966171168
    %v2858 = vunpack.c.0.s8 %v2857
    %v2859 = vlaneseq
    %v2860 = vshrl.u32 %v2859, 7
    %v2861 = vsub.s32 %v2858, %v2860
    %v2862 = vrot.slane %v2834, %v2861
    %v2863 = vcombine.low %v2841, %v2848
    %v2864 = vcombine.low %v2855, %v2862
    %v2866 = vunpack.c.l.s4 1966171168
    %v2867 = vunpack.c.0.s8 %v2866
    %v2868 = vlaneseq
    %v2869 = vshrl.u32 %v2868, 7
    %v2870 = vsub.s32 %v2867, %v2869
    %v2871 = vrot.slane %v2863, %v2870
    %v2873 = vunpack.c.l.s4 1966171168
    %v2874 = vunpack.c.0.s8 %v2873
    %v2875 = vlaneseq
    %v2876 = vshrl.u32 %v2875, 7
    %v2877 = vsub.s32 %v2874, %v2876
    %v2878 = vrot.slane %v2864, %v2877
    %v2879 = vcombine.low %v2871, %v2878
    %v2880 = vcombine.low %v1485, %v1489
    %v2881 = vcombine.low %v1493, %v1497
    %v2882 = vcombine.low %v1501, %v1505
    %v2883 = vcombine.low %v1509, %v1513
    %v2885 = vunpack.c.l.s4 1966171168
    %v2886 = vunpack.c.0.s8 %v2885
    %v2887 = vlaneseq
    %v2888 = vshrl.u32 %v2887, 7
    %v2889 = vsub.s32 %v2886, %v2888
    %v2890 = vrot.slane %v2880, %v2889
    %v2892 = vunpack.c.l.s4 1966171168
    %v2893 = vunpack.c.0.s8 %v2892
    %v2894 = vlaneseq
    %v2895 = vshrl.u32 %v2894, 7
    %v2896 = vsub.s32 %v2893, %v2895
    %v2897 = vrot.slane %v2881, %v2896
    %v2899 = vunpack.c.l.s4 1966171168
    %v2900 = vunpack.c.0.s8 %v2899
    %v2901 = vlaneseq
    %v2902 = vshrl.u32 %v2901, 7
    %v2903 = vsub.s32 %v2900, %v2902
    %v2904 = vrot.slane %v2882, %v2903
    %v2906 = vunpack.c.l.s4 1966171168
    %v2907 = vunpack.c.0.s8 %v2906
    %v2908 = vlaneseq
    %v2909 = vshrl.u32 %v2908, 7
    %v2910 = vsub.s32 %v2907, %v2909
    %v2911 = vrot.slane %v2883, %v2910
    %v2912 = vcombine.low %v2890, %v2897
    %v2913 = vcombine.low %v2904, %v2911
    %v2915 = vunpack.c.l.s4 1966171168
    %v2916 = vunpack.c.0.s8 %v2915
    %v2917 = vlaneseq
    %v2918 = vshrl.u32 %v2917, 7
    %v2919 = vsub.s32 %v2916, %v2918
    %v2920 = vrot.slane %v2912, %v2919
    %v2922 = vunpack.c.l.s4 1966171168
    %v2923 = vunpack.c.0.s8 %v2922
    %v2924 = vlaneseq
    %v2925 = vshrl.u32 %v2924, 7
    %v2926 = vsub.s32 %v2923, %v2925
    %v2927 = vrot.slane %v2913, %v2926
    %v2928 = vcombine.low %v2920, %v2927
    %v2929 = vcombine.low %v1517, %v1521
    %v2930 = vcombine.low %v1525, %v1529
    %v2931 = vcombine.low %v1533, %v1537
    %v2932 = vcombine.low %v1541, %v1545
    %v2934 = vunpack.c.l.s4 1966171168
    %v2935 = vunpack.c.0.s8 %v2934
    %v2936 = vlaneseq
    %v2937 = vshrl.u32 %v2936, 7
    %v2938 = vsub.s32 %v2935, %v2937
    %v2939 = vrot.slane %v2929, %v2938
    %v2941 = vunpack.c.l.s4 1966171168
    %v2942 = vunpack.c.0.s8 %v2941
    %v2943 = vlaneseq
    %v2944 = vshrl.u32 %v2943, 7
    %v2945 = vsub.s32 %v2942, %v2944
    %v2946 = vrot.slane %v2930, %v2945
    %v2948 = vunpack.c.l.s4 1966171168
    %v2949 = vunpack.c.0.s8 %v2948
    %v2950 = vlaneseq
    %v2951 = vshrl.u32 %v2950, 7
    %v2952 = vsub.s32 %v2949, %v2951
    %v2953 = vrot.slane %v2931, %v2952
    %v2955 = vunpack.c.l.s4 1966171168
    %v2956 = vunpack.c.0.s8 %v2955
    %v2957 = vlaneseq
    %v2958 = vshrl.u32 %v2957, 7
    %v2959 = vsub.s32 %v2956, %v2958
    %v2960 = vrot.slane %v2932, %v2959
    %v2961 = vcombine.low %v2939, %v2946
    %v2962 = vcombine.low %v2953, %v2960
    %v2964 = vunpack.c.l.s4 1966171168
    %v2965 = vunpack.c.0.s8 %v2964
    %v2966 = vlaneseq
    %v2967 = vshrl.u32 %v2966, 7
    %v2968 = vsub.s32 %v2965, %v2967
    %v2969 = vrot.slane %v2961, %v2968
    %v2971 = vunpack.c.l.s4 1966171168
    %v2972 = vunpack.c.0.s8 %v2971
    %v2973 = vlaneseq
    %v2974 = vshrl.u32 %v2973, 7
    %v2975 = vsub.s32 %v2972, %v2974
    %v2976 = vrot.slane %v2962, %v2975
    %v2977 = vcombine.low %v2969, %v2976
    %v2978 = vcombine.low %v1549, %v1553
    %v2979 = vcombine.low %v1557, %v1561
    %v2980 = vcombine.low %v1565, %v1569
    %v2981 = vcombine.low %v1573, %v1577
    %v2983 = vunpack.c.l.s4 1966171168
    %v2984 = vunpack.c.0.s8 %v2983
    %v2985 = vlaneseq
    %v2986 = vshrl.u32 %v2985, 7
    %v2987 = vsub.s32 %v2984, %v2986
    %v2988 = vrot.slane %v2978, %v2987
    %v2990 = vunpack.c.l.s4 1966171168
    %v2991 = vunpack.c.0.s8 %v2990
    %v2992 = vlaneseq
    %v2993 = vshrl.u32 %v2992, 7
    %v2994 = vsub.s32 %v2991, %v2993
    %v2995 = vrot.slane %v2979, %v2994
    %v2997 = vunpack.c.l.s4 1966171168
    %v2998 = vunpack.c.0.s8 %v2997
    %v2999 = vlaneseq
    %v3000 = vshrl.u32 %v2999, 7
    %v3001 = vsub.s32 %v2998, %v3000
    %v3002 = vrot.slane %v2980, %v3001
    %v3004 = vunpack.c.l.s4 1966171168
    %v3005 = vunpack.c.0.s8 %v3004
    %v3006 = vlaneseq
    %v3007 = vshrl.u32 %v3006, 7
    %v3008 = vsub.s32 %v3005, %v3007
    %v3009 = vrot.slane %v2981, %v3008
    %v3010 = vcombine.low %v2988, %v2995
    %v3011 = vcombine.low %v3002, %v3009
    %v3013 = vunpack.c.l.s4 1966171168
    %v3014 = vunpack.c.0.s8 %v3013
    %v3015 = vlaneseq
    %v3016 = vshrl.u32 %v3015, 7
    %v3017 = vsub.s32 %v3014, %v3016
    %v3018 = vrot.slane %v3010, %v3017
    %v3020 = vunpack.c.l.s4 1966171168
    %v3021 = vunpack.c.0.s8 %v3020
    %v3022 = vlaneseq
    %v3023 = vshrl.u32 %v3022, 7
    %v3024 = vsub.s32 %v3021, %v3023
    %v3025 = vrot.slane %v3011, %v3024
    %v3026 = vcombine.low %v3018, %v3025
    %v3027 = vcombine.low %v1581, %v1585
    %v3028 = vcombine.low %v1589, %v1593
    %v3029 = vcombine.low %v1597, %v1601
    %v3030 = vcombine.low %v1605, %v1609
    %v3032 = vunpack.c.l.s4 1966171168
    %v3033 = vunpack.c.0.s8 %v3032
    %v3034 = vlaneseq
    %v3035 = vshrl.u32 %v3034, 7
    %v3036 = vsub.s32 %v3033, %v3035
    %v3037 = vrot.slane %v3027, %v3036
    %v3039 = vunpack.c.l.s4 1966171168
    %v3040 = vunpack.c.0.s8 %v3039
    %v3041 = vlaneseq
    %v3042 = vshrl.u32 %v3041, 7
    %v3043 = vsub.s32 %v3040, %v3042
    %v3044 = vrot.slane %v3028, %v3043
    %v3046 = vunpack.c.l.s4 1966171168
    %v3047 = vunpack.c.0.s8 %v3046
    %v3048 = vlaneseq
    %v3049 = vshrl.u32 %v3048, 7
    %v3050 = vsub.s32 %v3047, %v3049
    %v3051 = vrot.slane %v3029, %v3050
    %v3053 = vunpack.c.l.s4 1966171168
    %v3054 = vunpack.c.0.s8 %v3053
    %v3055 = vlaneseq
    %v3056 = vshrl.u32 %v3055, 7
    %v3057 = vsub.s32 %v3054, %v3056
    %v3058 = vrot.slane %v3030, %v3057
    %v3059 = vcombine.low %v3037, %v3044
    %v3060 = vcombine.low %v3051, %v3058
    %v3062 = vunpack.c.l.s4 1966171168
    %v3063 = vunpack.c.0.s8 %v3062
    %v3064 = vlaneseq
    %v3065 = vshrl.u32 %v3064, 7
    %v3066 = vsub.s32 %v3063, %v3065
    %v3067 = vrot.slane %v3059, %v3066
    %v3069 = vunpack.c.l.s4 1966171168
    %v3070 = vunpack.c.0.s8 %v3069
    %v3071 = vlaneseq
    %v3072 = vshrl.u32 %v3071, 7
    %v3073 = vsub.s32 %v3070, %v3072
    %v3074 = vrot.slane %v3060, %v3073
    %v3075 = vcombine.low %v3067, %v3074
    %v3076 = vcombine.low %v1613, %v1617
    %v3077 = vcombine.low %v1621, %v1625
    %v3078 = vcombine.low %v1629, %v1633
    %v3079 = vcombine.low %v1637, %v1641
    %v3081 = vunpack.c.l.s4 1966171168
    %v3082 = vunpack.c.0.s8 %v3081
    %v3083 = vlaneseq
    %v3084 = vshrl.u32 %v3083, 7
    %v3085 = vsub.s32 %v3082, %v3084
    %v3086 = vrot.slane %v3076, %v3085
    %v3088 = vunpack.c.l.s4 1966171168
    %v3089 = vunpack.c.0.s8 %v3088
    %v3090 = vlaneseq
    %v3091 = vshrl.u32 %v3090, 7
    %v3092 = vsub.s32 %v3089, %v3091
    %v3093 = vrot.slane %v3077, %v3092
    %v3095 = vunpack.c.l.s4 1966171168
    %v3096 = vunpack.c.0.s8 %v3095
    %v3097 = vlaneseq
    %v3098 = vshrl.u32 %v3097, 7
    %v3099 = vsub.s32 %v3096, %v3098
    %v3100 = vrot.slane %v3078, %v3099
    %v3102 = vunpack.c.l.s4 1966171168
    %v3103 = vunpack.c.0.s8 %v3102
    %v3104 = vlaneseq
    %v3105 = vshrl.u32 %v3104, 7
    %v3106 = vsub.s32 %v3103, %v3105
    %v3107 = vrot.slane %v3079, %v3106
    %v3108 = vcombine.low %v3086, %v3093
    %v3109 = vcombine.low %v3100, %v3107
    %v3111 = vunpack.c.l.s4 1966171168
    %v3112 = vunpack.c.0.s8 %v3111
    %v3113 = vlaneseq
    %v3114 = vshrl.u32 %v3113, 7
    %v3115 = vsub.s32 %v3112, %v3114
    %v3116 = vrot.slane %v3108, %v3115
    %v3118 = vunpack.c.l.s4 1966171168
    %v3119 = vunpack.c.0.s8 %v3118
    %v3120 = vlaneseq
    %v3121 = vshrl.u32 %v3120, 7
    %v3122 = vsub.s32 %v3119, %v3121
    %v3123 = vrot.slane %v3109, %v3122
    %v3124 = vcombine.low %v3116, %v3123
    %v3125 = vcombine.low %v1645, %v1649
    %v3126 = vcombine.low %v1653, %v1657
    %v3127 = vcombine.low %v1661, %v1665
    %v3128 = vcombine.low %v1669, %v1673
    %v3130 = vunpack.c.l.s4 1966171168
    %v3131 = vunpack.c.0.s8 %v3130
    %v3132 = vlaneseq
    %v3133 = vshrl.u32 %v3132, 7
    %v3134 = vsub.s32 %v3131, %v3133
    %v3135 = vrot.slane %v3125, %v3134
    %v3137 = vunpack.c.l.s4 1966171168
    %v3138 = vunpack.c.0.s8 %v3137
    %v3139 = vlaneseq
    %v3140 = vshrl.u32 %v3139, 7
    %v3141 = vsub.s32 %v3138, %v3140
    %v3142 = vrot.slane %v3126, %v3141
    %v3144 = vunpack.c.l.s4 1966171168
    %v3145 = vunpack.c.0.s8 %v3144
    %v3146 = vlaneseq
    %v3147 = vshrl.u32 %v3146, 7
    %v3148 = vsub.s32 %v3145, %v3147
    %v3149 = vrot.slane %v3127, %v3148
    %v3151 = vunpack.c.l.s4 1966171168
    %v3152 = vunpack.c.0.s8 %v3151
    %v3153 = vlaneseq
    %v3154 = vshrl.u32 %v3153, 7
    %v3155 = vsub.s32 %v3152, %v3154
    %v3156 = vrot.slane %v3128, %v3155
    %v3157 = vcombine.low %v3135, %v3142
    %v3158 = vcombine.low %v3149, %v3156
    %v3160 = vunpack.c.l.s4 1966171168
    %v3161 = vunpack.c.0.s8 %v3160
    %v3162 = vlaneseq
    %v3163 = vshrl.u32 %v3162, 7
    %v3164 = vsub.s32 %v3161, %v3163
    %v3165 = vrot.slane %v3157, %v3164
    %v3167 = vunpack.c.l.s4 1966171168
    %v3168 = vunpack.c.0.s8 %v3167
    %v3169 = vlaneseq
    %v3170 = vshrl.u32 %v3169, 7
    %v3171 = vsub.s32 %v3168, %v3170
    %v3172 = vrot.slane %v3158, %v3171
    %v3173 = vcombine.low %v3165, %v3172
    %v3174 = vcombine.low %v1677, %v1681
    %v3175 = vcombine.low %v1685, %v1689
    %v3176 = vcombine.low %v1693, %v1697
    %v3177 = vcombine.low %v1701, %v1705
    %v3179 = vunpack.c.l.s4 1966171168
    %v3180 = vunpack.c.0.s8 %v3179
    %v3181 = vlaneseq
    %v3182 = vshrl.u32 %v3181, 7
    %v3183 = vsub.s32 %v3180, %v3182
    %v3184 = vrot.slane %v3174, %v3183
    %v3186 = vunpack.c.l.s4 1966171168
    %v3187 = vunpack.c.0.s8 %v3186
    %v3188 = vlaneseq
    %v3189 = vshrl.u32 %v3188, 7
    %v3190 = vsub.s32 %v3187, %v3189
    %v3191 = vrot.slane %v3175, %v3190
    %v3193 = vunpack.c.l.s4 1966171168
    %v3194 = vunpack.c.0.s8 %v3193
    %v3195 = vlaneseq
    %v3196 = vshrl.u32 %v3195, 7
    %v3197 = vsub.s32 %v3194, %v3196
    %v3198 = vrot.slane %v3176, %v3197
    %v3200 = vunpack.c.l.s4 1966171168
    %v3201 = vunpack.c.0.s8 %v3200
    %v3202 = vlaneseq
    %v3203 = vshrl.u32 %v3202, 7
    %v3204 = vsub.s32 %v3201, %v3203
    %v3205 = vrot.slane %v3177, %v3204
    %v3206 = vcombine.low %v3184, %v3191
    %v3207 = vcombine.low %v3198, %v3205
    %v3209 = vunpack.c.l.s4 1966171168
    %v3210 = vunpack.c.0.s8 %v3209
    %v3211 = vlaneseq
    %v3212 = vshrl.u32 %v3211, 7
    %v3213 = vsub.s32 %v3210, %v3212
    %v3214 = vrot.slane %v3206, %v3213
    %v3216 = vunpack.c.l.s4 1966171168
    %v3217 = vunpack.c.0.s8 %v3216
    %v3218 = vlaneseq
    %v3219 = vshrl.u32 %v3218, 7
    %v3220 = vsub.s32 %v3217, %v3219
    %v3221 = vrot.slane %v3207, %v3220
    %v3222 = vcombine.low %v3214, %v3221
    %v3223 = vcombine.low %v1709, %v1713
    %v3224 = vcombine.low %v1717, %v1721
    %v3225 = vcombine.low %v1725, %v1729
    %v3226 = vcombine.low %v1733, %v1737
    %v3228 = vunpack.c.l.s4 1966171168
    %v3229 = vunpack.c.0.s8 %v3228
    %v3230 = vlaneseq
    %v3231 = vshrl.u32 %v3230, 7
    %v3232 = vsub.s32 %v3229, %v3231
    %v3233 = vrot.slane %v3223, %v3232
    %v3235 = vunpack.c.l.s4 1966171168
    %v3236 = vunpack.c.0.s8 %v3235
    %v3237 = vlaneseq
    %v3238 = vshrl.u32 %v3237, 7
    %v3239 = vsub.s32 %v3236, %v3238
    %v3240 = vrot.slane %v3224, %v3239
    %v3242 = vunpack.c.l.s4 1966171168
    %v3243 = vunpack.c.0.s8 %v3242
    %v3244 = vlaneseq
    %v3245 = vshrl.u32 %v3244, 7
    %v3246 = vsub.s32 %v3243, %v3245
    %v3247 = vrot.slane %v3225, %v3246
    %v3249 = vunpack.c.l.s4 1966171168
    %v3250 = vunpack.c.0.s8 %v3249
    %v3251 = vlaneseq
    %v3252 = vshrl.u32 %v3251, 7
    %v3253 = vsub.s32 %v3250, %v3252
    %v3254 = vrot.slane %v3226, %v3253
    %v3255 = vcombine.low %v3233, %v3240
    %v3256 = vcombine.low %v3247, %v3254
    %v3258 = vunpack.c.l.s4 1966171168
    %v3259 = vunpack.c.0.s8 %v3258
    %v3260 = vlaneseq
    %v3261 = vshrl.u32 %v3260, 7
    %v3262 = vsub.s32 %v3259, %v3261
    %v3263 = vrot.slane %v3255, %v3262
    %v3265 = vunpack.c.l.s4 1966171168
    %v3266 = vunpack.c.0.s8 %v3265
    %v3267 = vlaneseq
    %v3268 = vshrl.u32 %v3267, 7
    %v3269 = vsub.s32 %v3266, %v3268
    %v3270 = vrot.slane %v3256, %v3269
    %v3271 = vcombine.low %v3263, %v3270
    %v3272 = vcombine.low %v1741, %v1745
    %v3273 = vcombine.low %v1749, %v1753
    %v3274 = vcombine.low %v1757, %v1761
    %v3275 = vcombine.low %v1765, %v1769
    %v3277 = vunpack.c.l.s4 1966171168
    %v3278 = vunpack.c.0.s8 %v3277
    %v3279 = vlaneseq
    %v3280 = vshrl.u32 %v3279, 7
    %v3281 = vsub.s32 %v3278, %v3280
    %v3282 = vrot.slane %v3272, %v3281
    %v3284 = vunpack.c.l.s4 1966171168
    %v3285 = vunpack.c.0.s8 %v3284
    %v3286 = vlaneseq
    %v3287 = vshrl.u32 %v3286, 7
    %v3288 = vsub.s32 %v3285, %v3287
    %v3289 = vrot.slane %v3273, %v3288
    %v3291 = vunpack.c.l.s4 1966171168
    %v3292 = vunpack.c.0.s8 %v3291
    %v3293 = vlaneseq
    %v3294 = vshrl.u32 %v3293, 7
    %v3295 = vsub.s32 %v3292, %v3294
    %v3296 = vrot.slane %v3274, %v3295
    %v3298 = vunpack.c.l.s4 1966171168
    %v3299 = vunpack.c.0.s8 %v3298
    %v3300 = vlaneseq
    %v3301 = vshrl.u32 %v3300, 7
    %v3302 = vsub.s32 %v3299, %v3301
    %v3303 = vrot.slane %v3275, %v3302
    %v3304 = vcombine.low %v3282, %v3289
    %v3305 = vcombine.low %v3296, %v3303
    %v3307 = vunpack.c.l.s4 1966171168
    %v3308 = vunpack.c.0.s8 %v3307
    %v3309 = vlaneseq
    %v3310 = vshrl.u32 %v3309, 7
    %v3311 = vsub.s32 %v3308, %v3310
    %v3312 = vrot.slane %v3304, %v3311
    %v3314 = vunpack.c.l.s4 1966171168
    %v3315 = vunpack.c.0.s8 %v3314
    %v3316 = vlaneseq
    %v3317 = vshrl.u32 %v3316, 7
    %v3318 = vsub.s32 %v3315, %v3317
    %v3319 = vrot.slane %v3305, %v3318
    %v3320 = vcombine.low %v3312, %v3319
    %v3321 = vcombine.low %v1773, %v1777
    %v3322 = vcombine.low %v1781, %v1785
    %v3323 = vcombine.low %v1789, %v1793
    %v3324 = vcombine.low %v1797, %v1801
    %v3326 = vunpack.c.l.s4 1966171168
    %v3327 = vunpack.c.0.s8 %v3326
    %v3328 = vlaneseq
    %v3329 = vshrl.u32 %v3328, 7
    %v3330 = vsub.s32 %v3327, %v3329
    %v3331 = vrot.slane %v3321, %v3330
    %v3333 = vunpack.c.l.s4 1966171168
    %v3334 = vunpack.c.0.s8 %v3333
    %v3335 = vlaneseq
    %v3336 = vshrl.u32 %v3335, 7
    %v3337 = vsub.s32 %v3334, %v3336
    %v3338 = vrot.slane %v3322, %v3337
    %v3340 = vunpack.c.l.s4 1966171168
    %v3341 = vunpack.c.0.s8 %v3340
    %v3342 = vlaneseq
    %v3343 = vshrl.u32 %v3342, 7
    %v3344 = vsub.s32 %v3341, %v3343
    %v3345 = vrot.slane %v3323, %v3344
    %v3347 = vunpack.c.l.s4 1966171168
    %v3348 = vunpack.c.0.s8 %v3347
    %v3349 = vlaneseq
    %v3350 = vshrl.u32 %v3349, 7
    %v3351 = vsub.s32 %v3348, %v3350
    %v3352 = vrot.slane %v3324, %v3351
    %v3353 = vcombine.low %v3331, %v3338
    %v3354 = vcombine.low %v3345, %v3352
    %v3356 = vunpack.c.l.s4 1966171168
    %v3357 = vunpack.c.0.s8 %v3356
    %v3358 = vlaneseq
    %v3359 = vshrl.u32 %v3358, 7
    %v3360 = vsub.s32 %v3357, %v3359
    %v3361 = vrot.slane %v3353, %v3360
    %v3363 = vunpack.c.l.s4 1966171168
    %v3364 = vunpack.c.0.s8 %v3363
    %v3365 = vlaneseq
    %v3366 = vshrl.u32 %v3365, 7
    %v3367 = vsub.s32 %v3364, %v3366
    %v3368 = vrot.slane %v3354, %v3367
    %v3369 = vcombine.low %v3361, %v3368
    %3370 = vset.pattern.permute.xlu0 0
    %3371 = vperm.xlu0 %3370, %v1850
    %v3372 = vpop.permute.xlu0 %3371
    %3373 = vset.pattern.permute.xlu0 0
    %3374 = vperm.xlu0 %3373, %v1899
    %v3375 = vpop.permute.xlu0 %3374
    %3376 = vset.pattern.permute.xlu0 0
    %3377 = vperm.xlu0 %3376, %v1948
    %v3378 = vpop.permute.xlu0 %3377
    %3379 = vset.pattern.permute.xlu0 0
    %3380 = vperm.xlu0 %3379, %v1997
    %v3381 = vpop.permute.xlu0 %3380
    %3382 = vset.pattern.permute.xlu0 0
    %3383 = vperm.xlu0 %3382, %v2046
    %v3384 = vpop.permute.xlu0 %3383
    %3385 = vset.pattern.permute.xlu0 0
    %3386 = vperm.xlu0 %3385, %v2095
    %v3387 = vpop.permute.xlu0 %3386
    %3388 = vset.pattern.permute.xlu0 0
    %3389 = vperm.xlu0 %3388, %v2144
    %v3390 = vpop.permute.xlu0 %3389
    %3391 = vset.pattern.permute.xlu0 0
    %3392 = vperm.xlu0 %3391, %v2193
    %v3393 = vpop.permute.xlu0 %3392
    %3394 = vset.pattern.permute.xlu0 0
    %3395 = vperm.xlu0 %3394, %v2242
    %v3396 = vpop.permute.xlu0 %3395
    %3397 = vset.pattern.permute.xlu0 0
    %3398 = vperm.xlu0 %3397, %v2291
    %v3399 = vpop.permute.xlu0 %3398
    %3400 = vset.pattern.permute.xlu0 0
    %3401 = vperm.xlu0 %3400, %v2340
    %v3402 = vpop.permute.xlu0 %3401
    %3403 = vset.pattern.permute.xlu0 0
    %3404 = vperm.xlu0 %3403, %v2389
    %v3405 = vpop.permute.xlu0 %3404
    %3406 = vset.pattern.permute.xlu0 0
    %3407 = vperm.xlu0 %3406, %v2438
    %v3408 = vpop.permute.xlu0 %3407
    %3409 = vset.pattern.permute.xlu0 0
    %3410 = vperm.xlu0 %3409, %v2487
    %v3411 = vpop.permute.xlu0 %3410
    %3412 = vset.pattern.permute.xlu0 0
    %3413 = vperm.xlu0 %3412, %v2536
    %v3414 = vpop.permute.xlu0 %3413
    %3415 = vset.pattern.permute.xlu0 0
    %3416 = vperm.xlu0 %3415, %v2585
    %v3417 = vpop.permute.xlu0 %3416
    %3418 = vset.pattern.permute.xlu0 0
    %3419 = vperm.xlu0 %3418, %v2634
    %v3420 = vpop.permute.xlu0 %3419
    %3421 = vset.pattern.permute.xlu0 0
    %3422 = vperm.xlu0 %3421, %v2683
    %v3423 = vpop.permute.xlu0 %3422
    %3424 = vset.pattern.permute.xlu0 0
    %3425 = vperm.xlu0 %3424, %v2732
    %v3426 = vpop.permute.xlu0 %3425
    %3427 = vset.pattern.permute.xlu0 0
    %3428 = vperm.xlu0 %3427, %v2781
    %v3429 = vpop.permute.xlu0 %3428
    %3430 = vset.pattern.permute.xlu0 0
    %3431 = vperm.xlu0 %3430, %v2830
    %v3432 = vpop.permute.xlu0 %3431
    %3433 = vset.pattern.permute.xlu0 0
    %3434 = vperm.xlu0 %3433, %v2879
    %v3435 = vpop.permute.xlu0 %3434
    %3436 = vset.pattern.permute.xlu0 0
    %3437 = vperm.xlu0 %3436, %v2928
    %v3438 = vpop.permute.xlu0 %3437
    %3439 = vset.pattern.permute.xlu0 0
    %3440 = vperm.xlu0 %3439, %v2977
    %v3441 = vpop.permute.xlu0 %3440
    %3442 = vset.pattern.permute.xlu0 0
    %3443 = vperm.xlu0 %3442, %v3026
    %v3444 = vpop.permute.xlu0 %3443
    %3445 = vset.pattern.permute.xlu0 0
    %3446 = vperm.xlu0 %3445, %v3075
    %v3447 = vpop.permute.xlu0 %3446
    %3448 = vset.pattern.permute.xlu0 0
    %3449 = vperm.xlu0 %3448, %v3124
    %v3450 = vpop.permute.xlu0 %3449
    %3451 = vset.pattern.permute.xlu0 0
    %3452 = vperm.xlu0 %3451, %v3173
    %v3453 = vpop.permute.xlu0 %3452
    %3454 = vset.pattern.permute.xlu0 0
    %3455 = vperm.xlu0 %3454, %v3222
    %v3456 = vpop.permute.xlu0 %3455
    %3457 = vset.pattern.permute.xlu0 0
    %3458 = vperm.xlu0 %3457, %v3271
    %v3459 = vpop.permute.xlu0 %3458
    %3460 = vset.pattern.permute.xlu0 0
    %3461 = vperm.xlu0 %3460, %v3320
    %v3462 = vpop.permute.xlu0 %3461
    %3463 = vset.pattern.permute.xlu0 0
    %3464 = vperm.xlu0 %3463, %v3369
    %v3465 = vpop.permute.xlu0 %3464
    %v3466 = vlaneseq
    %v3467 = vand.u32 %v3466, 127
    %v3468 = vlaneseq
    %v3469 = vshrl.u32 %v3468, 7
    %v3470 = vsub.s32 %v3467, %v3469
    %v3471 = vrot.slane %v3372, %v3470
    %v3472 = vadd.s32 %v3467, 4294967288
    %v3473 = vlaneseq
    %v3474 = vshrl.u32 %v3473, 7
    %v3475 = vsub.s32 %v3472, %v3474
    %v3476 = vrot.slane %v3375, %v3475
    %vm3477 = vcmask 130112
    %v3478 = vsel %vm3477, %v3476, %v3471
    %v3479 = vadd.s32 %v3467, 4294967280
    %v3480 = vlaneseq
    %v3481 = vshrl.u32 %v3480, 7
    %v3482 = vsub.s32 %v3479, %v3481
    %v3483 = vrot.slane %v3378, %v3482
    %vm3484 = vcmask 195712
    %v3485 = vsel %vm3484, %v3483, %v3478
    %v3486 = vadd.s32 %v3467, 4294967272
    %v3487 = vlaneseq
    %v3488 = vshrl.u32 %v3487, 7
    %v3489 = vsub.s32 %v3486, %v3488
    %v3490 = vrot.slane %v3381, %v3489
    %vm3491 = vcmask 261312
    %v3492 = vsel %vm3491, %v3490, %v3485
    %v3493 = vadd.s32 %v3467, 4294967264
    %v3494 = vlaneseq
    %v3495 = vshrl.u32 %v3494, 7
    %v3496 = vsub.s32 %v3493, %v3495
    %v3497 = vrot.slane %v3384, %v3496
    %vm3498 = vcmask 326912
    %v3499 = vsel %vm3498, %v3497, %v3492
    %v3500 = vadd.s32 %v3467, 4294967256
    %v3501 = vlaneseq
    %v3502 = vshrl.u32 %v3501, 7
    %v3503 = vsub.s32 %v3500, %v3502
    %v3504 = vrot.slane %v3387, %v3503
    %vm3505 = vcmask 392512
    %v3506 = vsel %vm3505, %v3504, %v3499
    %v3507 = vadd.s32 %v3467, 4294967248
    %v3508 = vlaneseq
    %v3509 = vshrl.u32 %v3508, 7
    %v3510 = vsub.s32 %v3507, %v3509
    %v3511 = vrot.slane %v3390, %v3510
    %vm3512 = vcmask 458112
    %v3513 = vsel %vm3512, %v3511, %v3506
    %v3514 = vadd.s32 %v3467, 4294967240
    %v3515 = vlaneseq
    %v3516 = vshrl.u32 %v3515, 7
    %v3517 = vsub.s32 %v3514, %v3516
    %v3518 = vrot.slane %v3393, %v3517
    %vm3519 = vcmask 523712
    %v3520 = vsel %vm3519, %v3518, %v3513
    %v3521 = vadd.s32 %v3467, 4294967232
    %v3522 = vlaneseq
    %v3523 = vshrl.u32 %v3522, 7
    %v3524 = vsub.s32 %v3521, %v3523
    %v3525 = vrot.slane %v3396, %v3524
    %vm3526 = vcmask 589312
    %v3527 = vsel %vm3526, %v3525, %v3520
    %v3528 = vadd.s32 %v3467, 4294967224
    %v3529 = vlaneseq
    %v3530 = vshrl.u32 %v3529, 7
    %v3531 = vsub.s32 %v3528, %v3530
    %v3532 = vrot.slane %v3399, %v3531
    %vm3533 = vcmask 654912
    %v3534 = vsel %vm3533, %v3532, %v3527
    %v3535 = vadd.s32 %v3467, 4294967216
    %v3536 = vlaneseq
    %v3537 = vshrl.u32 %v3536, 7
    %v3538 = vsub.s32 %v3535, %v3537
    %v3539 = vrot.slane %v3402, %v3538
    %vm3540 = vcmask 720512
    %v3541 = vsel %vm3540, %v3539, %v3534
    %v3542 = vadd.s32 %v3467, 4294967208
    %v3543 = vlaneseq
    %v3544 = vshrl.u32 %v3543, 7
    %v3545 = vsub.s32 %v3542, %v3544
    %v3546 = vrot.slane %v3405, %v3545
    %vm3547 = vcmask 786112
    %v3548 = vsel %vm3547, %v3546, %v3541
    %v3549 = vadd.s32 %v3467, 4294967200
    %v3550 = vlaneseq
    %v3551 = vshrl.u32 %v3550, 7
    %v3552 = vsub.s32 %v3549, %v3551
    %v3553 = vrot.slane %v3408, %v3552
    %vm3554 = vcmask 851712
    %v3555 = vsel %vm3554, %v3553, %v3548
    %v3556 = vadd.s32 %v3467, 4294967192
    %v3557 = vlaneseq
    %v3558 = vshrl.u32 %v3557, 7
    %v3559 = vsub.s32 %v3556, %v3558
    %v3560 = vrot.slane %v3411, %v3559
    %vm3561 = vcmask 917312
    %v3562 = vsel %vm3561, %v3560, %v3555
    %v3563 = vadd.s32 %v3467, 4294967184
    %v3564 = vlaneseq
    %v3565 = vshrl.u32 %v3564, 7
    %v3566 = vsub.s32 %v3563, %v3565
    %v3567 = vrot.slane %v3414, %v3566
    %vm3568 = vcmask 982912
    %v3569 = vsel %vm3568, %v3567, %v3562
    %v3570 = vadd.s32 %v3467, 4294967176
    %v3571 = vlaneseq
    %v3572 = vshrl.u32 %v3571, 7
    %v3573 = vsub.s32 %v3570, %v3572
    %v3574 = vrot.slane %v3417, %v3573
    %vm3575 = vcmask 1048512
    %v3576 = vsel %vm3575, %v3574, %v3569
    %v3577 = vlaneseq
    %v3578 = vshrl.u32 %v3577, 7
    %v3579 = vsub.s32 %v3467, %v3578
    %v3580 = vrot.slane %v3420, %v3579
    %v3581 = vlaneseq
    %v3582 = vshrl.u32 %v3581, 7
    %v3583 = vsub.s32 %v3472, %v3582
    %v3584 = vrot.slane %v3423, %v3583
    %v3585 = vsel %vm3477, %v3584, %v3580
    %v3586 = vlaneseq
    %v3587 = vshrl.u32 %v3586, 7
    %v3588 = vsub.s32 %v3479, %v3587
    %v3589 = vrot.slane %v3426, %v3588
    %v3590 = vsel %vm3484, %v3589, %v3585
    %v3591 = vlaneseq
    %v3592 = vshrl.u32 %v3591, 7
    %v3593 = vsub.s32 %v3486, %v3592
    %v3594 = vrot.slane %v3429, %v3593
    %v3595 = vsel %vm3491, %v3594, %v3590
    %v3596 = vlaneseq
    %v3597 = vshrl.u32 %v3596, 7
    %v3598 = vsub.s32 %v3493, %v3597
    %v3599 = vrot.slane %v3432, %v3598
    %v3600 = vsel %vm3498, %v3599, %v3595
    %v3601 = vlaneseq
    %v3602 = vshrl.u32 %v3601, 7
    %v3603 = vsub.s32 %v3500, %v3602
    %v3604 = vrot.slane %v3435, %v3603
    %v3605 = vsel %vm3505, %v3604, %v3600
    %v3606 = vlaneseq
    %v3607 = vshrl.u32 %v3606, 7
    %v3608 = vsub.s32 %v3507, %v3607
    %v3609 = vrot.slane %v3438, %v3608
    %v3610 = vsel %vm3512, %v3609, %v3605
    %v3611 = vlaneseq
    %v3612 = vshrl.u32 %v3611, 7
    %v3613 = vsub.s32 %v3514, %v3612
    %v3614 = vrot.slane %v3441, %v3613
    %v3615 = vsel %vm3519, %v3614, %v3610
    %v3616 = vlaneseq
    %v3617 = vshrl.u32 %v3616, 7
    %v3618 = vsub.s32 %v3521, %v3617
    %v3619 = vrot.slane %v3444, %v3618
    %v3620 = vsel %vm3526, %v3619, %v3615
    %v3621 = vlaneseq
    %v3622 = vshrl.u32 %v3621, 7
    %v3623 = vsub.s32 %v3528, %v3622
    %v3624 = vrot.slane %v3447, %v3623
    %v3625 = vsel %vm3533, %v3624, %v3620
    %v3626 = vlaneseq
    %v3627 = vshrl.u32 %v3626, 7
    %v3628 = vsub.s32 %v3535, %v3627
    %v3629 = vrot.slane %v3450, %v3628
    %v3630 = vsel %vm3540, %v3629, %v3625
    %v3631 = vlaneseq
    %v3632 = vshrl.u32 %v3631, 7
    %v3633 = vsub.s32 %v3542, %v3632
    %v3634 = vrot.slane %v3453, %v3633
    %v3635 = vsel %vm3547, %v3634, %v3630
    %v3636 = vlaneseq
    %v3637 = vshrl.u32 %v3636, 7
    %v3638 = vsub.s32 %v3549, %v3637
    %v3639 = vrot.slane %v3456, %v3638
    %v3640 = vsel %vm3554, %v3639, %v3635
    %v3641 = vlaneseq
    %v3642 = vshrl.u32 %v3641, 7
    %v3643 = vsub.s32 %v3556, %v3642
    %v3644 = vrot.slane %v3459, %v3643
    %v3645 = vsel %vm3561, %v3644, %v3640
    %v3646 = vlaneseq
    %v3647 = vshrl.u32 %v3646, 7
    %v3648 = vsub.s32 %v3563, %v3647
    %v3649 = vrot.slane %v3462, %v3648
    %v3650 = vsel %vm3568, %v3649, %v3645
    %v3651 = vlaneseq
    %v3652 = vshrl.u32 %v3651, 7
    %v3653 = vsub.s32 %v3570, %v3652
    %v3654 = vrot.slane %v3465, %v3653
    %v3655 = vsel %vm3575, %v3654, %v3650
    %v3656 = vcombine.low %v3576, %v3655
    %v3658 = vunpack.c.l.s4 1966171168
    %v3659 = vunpack.c.0.s8 %v3658
    %v3660 = vlaneseq
    %v3661 = vshrl.u32 %v3660, 7
    %v3662 = vsub.s32 %v3659, %v3661
    %v3663 = vrot.slane %v3656, %v3662
    %v3665 = vunpack.c.l.s4 1966171168
    %v3666 = vunpack.c.0.s8 %v3665
    %v3667 = vlaneseq
    %v3668 = vshrl.u32 %v3667, 7
    %v3669 = vsub.s32 %v3666, %v3668
    %v3670 = vrot.slane %v3663, %v3669
    %v3672 = vlaneseq
    %vm3673 = vcmp.ge.s32.totalorder %v3672, 0
    %vm3674 = vcmp.lt.s32.totalorder %v3672, 256
    %vm3675 = vmand %vm3673, %vm3674
    %3676 = vst.msk [vmem:[#allocation2] sm:$0x3] %vm3675, %v3670
    // Predicated region
    $region26: #{tpu_custom_call.1} parent=1 // pred_check
      _
    $region27: #{tpu_custom_call.1} parent=1 // pred_check_branch
      %3678 = sbr.rel (0) target = $region29
    $region28: #{tpu_custom_call.1} parent=1 // pred_region
      %s3680 = ssub.s32 32, 32
      %3681 = vsyncadd [#allocation3], %s3680
      %s3683 = sshll.u32 [#allocation2], 4
      %s3684 = int_to_ptr.vmem [resolvable:$true] %s3683
      %3686 = dma.vmem_to_hbm [thread:$0]  %s3684, 32, %s6, [#allocation3]
    $region29: #{tpu_custom_call.1} parent=1 // pred_fallthru
      _
    // Predicated region
    $region30: #{tpu_custom_call.1} parent=1 // pred_check
      _
    $region31: #{tpu_custom_call.1} parent=1 // pred_check_branch
      %3688 = sbr.rel (0) target = $region33
    $region32: #{tpu_custom_call.1} parent=1 // pred_region
      %3689 = dma.done [#allocation3], 32
    $region33: #{tpu_custom_call.1} parent=1 // pred_fallthru
      _
    %3690 = vsyncpa [#allocation3], 1

</llo_original>
